<compile_context>
chip_gen: v7x
topology: tpu7x:2x2x1
jax: 0.10.0
libtpu: 0.0.40
codegen_flags: <defaults>
</compile_context>

<pallas_src>
import functools

import jax
import jax.numpy as jnp
from jax.experimental import pallas as pl
from jax.experimental.pallas import tpu as pltpu

LN_EPS = 1e-5
NEG_INF = -1e30


# ----------------------------------------------------------------------------
# Pallas kernel: one batch tile, all heads fused
# ----------------------------------------------------------------------------
def _mha_kernel(x_ref, wv_ref, wk_ref, wq_ref, g_ref, b_ref, ebias_ref, vpe_ref,
                o_ref, *, num_heads, head_dim, mxu_dtype):
    bt, L, E = x_ref.shape
    cast = lambda a: a.astype(mxu_dtype)

    # Block-diagonal projections: one (bt*L, E) @ (E, E) matmul per weight.
    x2 = x_ref[...].reshape(bt * L, E)
    V2 = jnp.dot(cast(x2), wv_ref[...], preferred_element_type=jnp.float32)   # (bt*L, E)
    V2c = cast(V2)
    K2 = jnp.dot(V2c, wk_ref[...], preferred_element_type=jnp.float32)        # (bt*L, E)
    Q2 = jnp.dot(V2c, wq_ref[...], preferred_element_type=jnp.float32)        # pre-scaled

    V = V2.reshape(bt, L, E)
    K = K2.reshape(bt, L, E)
    Q = Q2.reshape(bt, L, E)

    ebias = ebias_ref[...]          # (L, L): scale*kpe.sum(-1) + mask bias (0 / -1e30)
    vpe = vpe_ref[...]              # (L, Dh): vpe.sum(-2)

    # Static head unroll (tiny H, Dh=8 -> per-head grid axis not worthwhile; see TODO above).
    for h in range(num_heads):
        lo = h * head_dim
        v_h = V[:, :, lo:lo + head_dim]                                        # (bt, L, Dh)
        k_h = K[:, :, lo:lo + head_dim]
        q_h = Q[:, :, lo:lo + head_dim]

        # Scaled energy (scale already folded into Wq and ebias).
        s = jnp.einsum('bqd,bkd->bqk', cast(q_h), cast(k_h),
                       preferred_element_type=jnp.float32) + ebias             # (bt, L, L)
        m = jnp.max(s, axis=-1, keepdims=True)
        p = jnp.exp(s - m)
        row_sum = jnp.sum(p, axis=-1, keepdims=True)

        # Deferred normalization: (L, Dh)-sized multiply with an EUP reciprocal
        # instead of an (L, L) divide before the matmul.
        out = jnp.einsum('bqk,bkd->bqd', cast(p), cast(v_h),
                         preferred_element_type=jnp.float32)
        out = out * pl.reciprocal(row_sum, approx=True) + vpe

        # LayerNorm over head_dim (per-head affine), then residual with projected values.
        mean = jnp.mean(out, axis=-1, keepdims=True)
        var = jnp.mean((out - mean) ** 2, axis=-1, keepdims=True)
        out = (out - mean) * jax.lax.rsqrt(var + LN_EPS)
        out = out * g_ref[h] + b_ref[h]

        # Write this head straight into its lane slice of the output block.
        o_ref[:, :, lo:lo + head_dim] = (out + v_h).astype(o_ref.dtype)


# ----------------------------------------------------------------------------
# Wrapper helpers
# ----------------------------------------------------------------------------
def _block_diag_T(w):
    """(H, Dh, Dh) per-head torch-Linear weights -> (E, E) block-diag of the W_h^T blocks."""
    H, Dh, _ = w.shape
    eye = jnp.eye(H, dtype=w.dtype)
    # out[h*Dh+i, g*Dh+j] = delta(h,g) * w[h, j, i]
    return jnp.einsum('hg,hji->higj', eye, w).reshape(H * Dh, H * Dh)


def _pick_batch_tile(B, max_tile=8):
    """Largest divisor of B (<= max_tile) that still leaves >= 2 grid steps (v7x megacore)."""
    best = 1
    for t in range(1, min(B, max_tile) + 1):
        if B % t == 0 and (B // t) >= 2:
            best = t
    return best


def _invariant_spec(shape):
    """Grid-invariant input: constant index_map, single-buffered (no double-buffer VMEM)."""
    n = len(shape)
    return pl.BlockSpec(shape, lambda b: (0,) * n, pipeline_mode=pl.Buffered(1))


# ----------------------------------------------------------------------------
# Wrapper
# ----------------------------------------------------------------------------
def multihead_attention(values, keys, queries, mask, values_pos_enc, keys_pos_enc, params,
                        *, use_bf16_matmuls=None, batch_tile=None):
    """Forward of MulitheadAttention (keys/queries args are ignored, as in the reference)."""
    del keys, queries  # MaskedAttentionHead re-projects from the projected values.
    B, L, E = values.shape
    H, Dh, _ = params["wv"].shape
    assert H * Dh == E

    if use_bf16_matmuls is None:
        # bf16 MXU operands pay off once the matmuls are non-trivial; keep f32 at tiny shapes.
        use_bf16_matmuls = (Dh >= 64 or L >= 128)
    mxu_dtype = jnp.bfloat16 if use_bf16_matmuls else jnp.float32

    scale = 1.0 / (Dh ** 0.5)

    # Block-diagonal weights (resident in VMEM across all grid steps); scale folded into Wq.
    wv_bd = _block_diag_T(params["wv"]).astype(mxu_dtype)
    wk_bd = _block_diag_T(params["wk"]).astype(mxu_dtype)
    wq_bd = (_block_diag_T(params["wq"]) * scale).astype(mxu_dtype)

    # Shared reductions precomputed once (identical across heads and batches).
    kpe_sum = jnp.sum(keys_pos_enc.astype(jnp.float32), axis=-1)        # (L, L)
    vpe_sum = jnp.sum(values_pos_enc.astype(jnp.float32), axis=-2)      # (L, Dh)

    # Mask folded into the (L, L) energy bias (batch-invariant mask, e.g. causal).
    if mask is None:
        mask_bias = jnp.zeros((L, L), jnp.float32)
    else:
        m = jnp.asarray(mask)
        if m.ndim == 3:
            assert m.shape[0] == 1, "fused energy bias assumes a batch-invariant mask"
            m = m[0]
        m = jnp.broadcast_to(m, (L, L))
        mask_bias = jnp.where(m == 0, NEG_INF, 0.0).astype(jnp.float32)
    energy_bias = scale * kpe_sum + mask_bias                           # (L, L), pre-scaled

    gamma = params["ln_g"].reshape(H, 1, Dh).astype(jnp.float32)
    beta = params["ln_b"].reshape(H, 1, Dh).astype(jnp.float32)

    if batch_tile is None:
        batch_tile = _pick_batch_tile(B)
    assert B % batch_tile == 0
    grid = (B // batch_tile,)

    kernel = functools.partial(_mha_kernel, num_heads=H, head_dim=Dh, mxu_dtype=mxu_dtype)

    return pl.pallas_call(
        kernel,
        out_shape=jax.ShapeDtypeStruct((B, L, E), jnp.float32),
        grid=grid,
        in_specs=[
            pl.BlockSpec((batch_tile, L, E), lambda b: (b, 0, 0)),  # x (values input)
            _invariant_spec((E, E)),                                # block-diag Wv^T
            _invariant_spec((E, E)),                                # block-diag Wk^T
            _invariant_spec((E, E)),                                # block-diag Wq^T (pre-scaled)
            _invariant_spec((H, 1, Dh)),                            # LN gamma
            _invariant_spec((H, 1, Dh)),                            # LN beta
            _invariant_spec((L, L)),                                # energy bias (kpe + mask)
            _invariant_spec((L, Dh)),                               # vpe sum
        ],
        out_specs=pl.BlockSpec((batch_tile, L, E), lambda b: (b, 0, 0)),
        compiler_params=pltpu.CompilerParams(
            dimension_semantics=("parallel",),          # v7x: 2 TCs split the batch tiles
            vmem_limit_bytes=48 * 1024 * 1024),
    )(values, wv_bd, wk_bd, wq_bd, gamma, beta, energy_bias, vpe_sum)


# ----------------------------------------------------------------------------
# Pure-JAX reference (mirrors the PyTorch module) for a runtime self-check
# ----------------------------------------------------------------------------
def _reference_mha(values, mask, values_pos_enc, keys_pos_enc, params):
    H, Dh, _ = params["wv"].shape
    vs = jnp.split(values, H, axis=-1)
    outs = []
    for h in range(H):
        v = vs[h] @ params["wv"][h].T
        k = v @ params["wk"][h].T
        q = v @ params["wq"][h].T
        energy = jnp.einsum('bld,bmd->blm', q, k) + keys_pos_enc.sum(-1)
        energy = jnp.where(mask == 0, -jnp.inf, energy)
        attn = jax.nn.softmax(energy / Dh ** 0.5, axis=-1)
        out = jnp.einsum('blm,bmd->bld', attn, v) + values_pos_enc.sum(-2)
        mean = out.mean(-1, keepdims=True)
        var = ((out - mean) ** 2).mean(-1, keepdims=True)
        out = (out - mean) / jnp.sqrt(var + LN_EPS)
        out = out * params["ln_g"][h] + params["ln_b"][h]
        outs.append(out + v)
    return jnp.concatenate(outs, axis=-1)


# ----------------------------------------------------------------------------
# Deterministic parameter initialization (synthetic, not a checkpoint load)
# ----------------------------------------------------------------------------
def init_mha_params(key, num_heads, head_dim):
    k0, k1, k2, k3, k4 = jax.random.split(key, 5)
    s = 0.2
    return {
        "wv": s * jax.random.normal(k0, (num_heads, head_dim, head_dim), jnp.float32),
        "wk": s * jax.random.normal(k1, (num_heads, head_dim, head_dim), jnp.float32),
        "wq": s * jax.random.normal(k2, (num_heads, head_dim, head_dim), jnp.float32),
        "ln_g": 1.0 + 0.1 * jax.random.normal(k3, (num_heads, head_dim), jnp.float32),
        "ln_b": 0.1 * jax.random.normal(k4, (num_heads, head_dim), jnp.float32),
    }


# ----------------------------------------------------------------------------
if __name__ == "__main__":
    B, L, hidden, num_heads = 2, 8, 32, 4
    head_dim = hidden // num_heads

    root = jax.random.PRNGKey(0)
    kp, k1, k2, k3, k4, k5 = jax.random.split(root, 6)

    params = init_mha_params(kp, num_heads, head_dim)

    values = jax.random.normal(k1, (B, L, hidden), jnp.float32)
    keys = jax.random.normal(k2, (B, L, hidden), jnp.float32)       # ignored by module
    queries = jax.random.normal(k3, (B, L, hidden), jnp.float32)    # ignored by module
    mask = jnp.tril(jnp.ones((L, L), jnp.float32))                  # causal (L, L)
    values_pos_enc = 0.1 * jax.random.normal(k4, (L, L, head_dim), jnp.float32)
    keys_pos_enc = 0.1 * jax.random.normal(k5, (L, L, head_dim), jnp.float32)

    ref = _reference_mha(values, mask, values_pos_enc, keys_pos_enc, params)

    # f32 MXU path (what the heuristic picks at this tiny shape) — tight check.
    fwd_f32 = jax.jit(functools.partial(multihead_attention, use_bf16_matmuls=False))
    out = fwd_f32(values, keys, queries, mask, values_pos_enc, keys_pos_enc, params)
    jax.block_until_ready(out)
    assert out.shape == (B, L, hidden)
    assert jnp.all(jnp.isfinite(out))
    assert jnp.allclose(out, ref, atol=5e-3, rtol=5e-3)

    # bf16 MXU-operand path (used automatically at realistic Dh/L) — loose sanity check.
    fwd_bf16 = jax.jit(functools.partial(multihead_attention, use_bf16_matmuls=True))
    out_bf16 = fwd_bf16(values, keys, queries, mask, values_pos_enc, keys_pos_enc, params)
    jax.block_until_ready(out_bf16)
    assert jnp.all(jnp.isfinite(out_bf16))
    assert jnp.allclose(out_bf16, ref, atol=1e-1, rtol=1e-1)

    print("KERNEL_OK")
</pallas_src>

<mosaic_0001>
module attributes {stable_mosaic.version = 11 : i64} {
  func.func @_mha_kernel(%arg0: i32, %arg1: memref<1x8x32xf32, #tpu.memory_space<vmem>>, %arg2: memref<32x32xf32, #tpu.memory_space<vmem>>, %arg3: memref<32x32xf32, #tpu.memory_space<vmem>>, %arg4: memref<32x32xf32, #tpu.memory_space<vmem>>, %arg5: memref<4x1x8xf32, #tpu.memory_space<vmem>>, %arg6: memref<4x1x8xf32, #tpu.memory_space<vmem>>, %arg7: memref<8x8xf32, #tpu.memory_space<vmem>>, %arg8: memref<8x8xf32, #tpu.memory_space<vmem>>, %arg9: memref<1x8x32xf32, #tpu.memory_space<vmem>>) attributes {dimension_semantics = [#tpu.dimension_semantics<parallel>], iteration_bounds = array<i64: 2>, scalar_prefetch = 0 : i64, scratch_operands = 0 : i64, tpu.core_type = #tpu.core_type<tc>, window_params = [{transform_indices = @transform_0, window_bounds = array<i64: 1, 8, 32>}, {pipeline_mode = #tpu.pipeline_mode<synchronous>, transform_indices = @transform_1, window_bounds = array<i64: 32, 32>}, {pipeline_mode = #tpu.pipeline_mode<synchronous>, transform_indices = @transform_2, window_bounds = array<i64: 32, 32>}, {pipeline_mode = #tpu.pipeline_mode<synchronous>, transform_indices = @transform_3, window_bounds = array<i64: 32, 32>}, {pipeline_mode = #tpu.pipeline_mode<synchronous>, transform_indices = @transform_4, window_bounds = array<i64: 4, 1, 8>}, {pipeline_mode = #tpu.pipeline_mode<synchronous>, transform_indices = @transform_5, window_bounds = array<i64: 4, 1, 8>}, {pipeline_mode = #tpu.pipeline_mode<synchronous>, transform_indices = @transform_6, window_bounds = array<i64: 8, 8>}, {pipeline_mode = #tpu.pipeline_mode<synchronous>, transform_indices = @transform_7, window_bounds = array<i64: 8, 8>}, {transform_indices = @transform_8, window_bounds = array<i64: 1, 8, 32>}]} {
    %c0 = arith.constant 0 : index
    %c0_0 = arith.constant 0 : index
    %c0_1 = arith.constant 0 : index
    %0 = vector.load %arg1[%c0, %c0_0, %c0_1] : memref<1x8x32xf32, #tpu.memory_space<vmem>>, vector<1x8x32xf32>
    %1 = vector.shape_cast %0 : vector<1x8x32xf32> to vector<8x32xf32>
    %c0_2 = arith.constant 0 : index
    %c0_3 = arith.constant 0 : index
    %2 = vector.load %arg2[%c0_2, %c0_3] : memref<32x32xf32, #tpu.memory_space<vmem>>, vector<32x32xf32>
    %cst = arith.constant dense<0.000000e+00> : vector<8x32xf32>
    %3 = tpu.matmul %1, %2, %cst {dimension_numbers = #tpu.dot_dimension_numbers<[1], [0], [0], [1], [0, 0, 1, 1], [], []>} : vector<8x32xf32>, vector<32x32xf32>, vector<8x32xf32> -> vector<8x32xf32>
    %c0_4 = arith.constant 0 : index
    %c0_5 = arith.constant 0 : index
    %4 = vector.load %arg3[%c0_4, %c0_5] : memref<32x32xf32, #tpu.memory_space<vmem>>, vector<32x32xf32>
    %cst_6 = arith.constant dense<0.000000e+00> : vector<8x32xf32>
    %5 = tpu.matmul %3, %4, %cst_6 {dimension_numbers = #tpu.dot_dimension_numbers<[1], [0], [0], [1], [0, 0, 1, 1], [], []>} : vector<8x32xf32>, vector<32x32xf32>, vector<8x32xf32> -> vector<8x32xf32>
    %c0_7 = arith.constant 0 : index
    %c0_8 = arith.constant 0 : index
    %6 = vector.load %arg4[%c0_7, %c0_8] : memref<32x32xf32, #tpu.memory_space<vmem>>, vector<32x32xf32>
    %cst_9 = arith.constant dense<0.000000e+00> : vector<8x32xf32>
    %7 = tpu.matmul %3, %6, %cst_9 {dimension_numbers = #tpu.dot_dimension_numbers<[1], [0], [0], [1], [0, 0, 1, 1], [], []>} : vector<8x32xf32>, vector<32x32xf32>, vector<8x32xf32> -> vector<8x32xf32>
    %8 = vector.shape_cast %3 : vector<8x32xf32> to vector<1x8x32xf32>
    %9 = vector.shape_cast %5 : vector<8x32xf32> to vector<1x8x32xf32>
    %10 = vector.shape_cast %7 : vector<8x32xf32> to vector<1x8x32xf32>
    %c0_10 = arith.constant 0 : index
    %c0_11 = arith.constant 0 : index
    %11 = vector.load %arg7[%c0_10, %c0_11] : memref<8x8xf32, #tpu.memory_space<vmem>>, vector<8x8xf32>
    %c0_12 = arith.constant 0 : index
    %c0_13 = arith.constant 0 : index
    %12 = vector.load %arg8[%c0_12, %c0_13] : memref<8x8xf32, #tpu.memory_space<vmem>>, vector<8x8xf32>
    %13 = vector.extract_strided_slice %8 {offsets = [0, 0, 0], sizes = [1, 8, 8], strides = [1, 1, 1]} : vector<1x8x32xf32> to vector<1x8x8xf32>
    %14 = vector.extract_strided_slice %9 {offsets = [0, 0, 0], sizes = [1, 8, 8], strides = [1, 1, 1]} : vector<1x8x32xf32> to vector<1x8x8xf32>
    %15 = vector.extract_strided_slice %10 {offsets = [0, 0, 0], sizes = [1, 8, 8], strides = [1, 1, 1]} : vector<1x8x32xf32> to vector<1x8x8xf32>
    "tpu.trace_start"() <{level = 10 : i32, message = "bqd,bkd->bqk"}> : () -> ()
    %cst_14 = arith.constant dense<0.000000e+00> : vector<1x8x8xf32>
    %16 = tpu.matmul %15, %14, %cst_14 {dimension_numbers = #tpu.dot_dimension_numbers<[2], [2], [1], [1], [0, 0, 0, 1, 1, 1], [0], [0]>} : vector<1x8x8xf32>, vector<1x8x8xf32>, vector<1x8x8xf32> -> vector<1x8x8xf32>
    "tpu.trace_stop"() : () -> ()
    %17 = vector.shape_cast %11 : vector<8x8xf32> to vector<1x8x8xf32>
    %18 = arith.addf %16, %17 : vector<1x8x8xf32>
    %cst_15 = arith.constant dense<0xFF800000> : vector<1x8xf32>
    %19 = vector.multi_reduction <maximumf>, %18, %cst_15 [2] : vector<1x8x8xf32> to vector<1x8xf32>
    %20 = vector.shape_cast %19 : vector<1x8xf32> to vector<1x8x1xf32>
    %21 = vector.broadcast %20 : vector<1x8x1xf32> to vector<1x8x8xf32>
    %22 = arith.subf %18, %21 : vector<1x8x8xf32>
    %23 = math.exp %22 : vector<1x8x8xf32>
    %cst_16 = arith.constant dense<0.000000e+00> : vector<1x8xf32>
    %24 = vector.multi_reduction <add>, %23, %cst_16 [2] : vector<1x8x8xf32> to vector<1x8xf32>
    %25 = vector.shape_cast %24 : vector<1x8xf32> to vector<1x8x1xf32>
    "tpu.trace_start"() <{level = 10 : i32, message = "bqk,bkd->bqd"}> : () -> ()
    %cst_17 = arith.constant dense<0.000000e+00> : vector<1x8x8xf32>
    %26 = tpu.matmul %23, %13, %cst_17 {dimension_numbers = #tpu.dot_dimension_numbers<[2], [1], [1], [2], [0, 0, 0, 1, 1, 2], [0], [0]>} : vector<1x8x8xf32>, vector<1x8x8xf32>, vector<1x8x8xf32> -> vector<1x8x8xf32>
    "tpu.trace_stop"() : () -> ()
    %27 = tpu.reciprocal %25 {approx = true} : vector<1x8x1xf32> -> vector<1x8x1xf32>
    %28 = vector.broadcast %27 : vector<1x8x1xf32> to vector<1x8x8xf32>
    %29 = arith.mulf %26, %28 : vector<1x8x8xf32>
    %30 = vector.shape_cast %12 : vector<8x8xf32> to vector<1x8x8xf32>
    %31 = arith.addf %29, %30 : vector<1x8x8xf32>
    %cst_18 = arith.constant dense<0.000000e+00> : vector<1x8xf32>
    %32 = vector.multi_reduction <add>, %31, %cst_18 [2] : vector<1x8x8xf32> to vector<1x8xf32>
    %33 = vector.shape_cast %32 : vector<1x8xf32> to vector<1x8x1xf32>
    %cst_19 = arith.constant 8.000000e+00 : f32
    %34 = vector.broadcast %cst_19 : f32 to vector<1x8x1xf32>
    %35 = arith.divf %33, %34 : vector<1x8x1xf32>
    %36 = vector.broadcast %35 : vector<1x8x1xf32> to vector<1x8x8xf32>
    %37 = arith.subf %31, %36 : vector<1x8x8xf32>
    %38 = arith.mulf %37, %37 : vector<1x8x8xf32>
    %cst_20 = arith.constant dense<0.000000e+00> : vector<1x8xf32>
    %39 = vector.multi_reduction <add>, %38, %cst_20 [2] : vector<1x8x8xf32> to vector<1x8xf32>
    %40 = vector.shape_cast %39 : vector<1x8xf32> to vector<1x8x1xf32>
    %cst_21 = arith.constant 8.000000e+00 : f32
    %41 = vector.broadcast %cst_21 : f32 to vector<1x8x1xf32>
    %42 = arith.divf %40, %41 : vector<1x8x1xf32>
    %43 = vector.broadcast %35 : vector<1x8x1xf32> to vector<1x8x8xf32>
    %44 = arith.subf %31, %43 : vector<1x8x8xf32>
    %cst_22 = arith.constant 9.99999974E-6 : f32
    %45 = vector.broadcast %cst_22 : f32 to vector<1x8x1xf32>
    %46 = arith.addf %42, %45 : vector<1x8x1xf32>
    %47 = math.rsqrt %46 : vector<1x8x1xf32>
    %48 = vector.broadcast %47 : vector<1x8x1xf32> to vector<1x8x8xf32>
    %49 = arith.mulf %44, %48 : vector<1x8x8xf32>
    %c0_23 = arith.constant 0 : index
    %c0_24 = arith.constant 0 : index
    %c0_25 = arith.constant 0 : index
    %50 = vector.load %arg5[%c0_23, %c0_24, %c0_25] : memref<4x1x8xf32, #tpu.memory_space<vmem>>, vector<1x1x8xf32>
    %51 = vector.shape_cast %50 : vector<1x1x8xf32> to vector<1x8xf32>
    %52 = vector.shape_cast %51 : vector<1x8xf32> to vector<1x1x8xf32>
    %53 = vector.broadcast %52 : vector<1x1x8xf32> to vector<1x8x8xf32>
    %54 = arith.mulf %49, %53 : vector<1x8x8xf32>
    %c0_26 = arith.constant 0 : index
    %c0_27 = arith.constant 0 : index
    %c0_28 = arith.constant 0 : index
    %55 = vector.load %arg6[%c0_26, %c0_27, %c0_28] : memref<4x1x8xf32, #tpu.memory_space<vmem>>, vector<1x1x8xf32>
    %56 = vector.shape_cast %55 : vector<1x1x8xf32> to vector<1x8xf32>
    %57 = vector.shape_cast %56 : vector<1x8xf32> to vector<1x1x8xf32>
    %58 = vector.broadcast %57 : vector<1x1x8xf32> to vector<1x8x8xf32>
    %59 = arith.addf %54, %58 : vector<1x8x8xf32>
    %60 = arith.addf %59, %13 : vector<1x8x8xf32>
    %c0_29 = arith.constant 0 : index
    %c0_30 = arith.constant 0 : index
    %c0_31 = arith.constant 0 : index
    %61 = vector.load %arg9[%c0_29, %c0_30, %c0_31] : memref<1x8x32xf32, #tpu.memory_space<vmem>>, vector<1x8x8xf32>
    tpu.vector_store %arg9[%c0_29, %c0_30, %c0_31], %60 {strides = array<i32>} : memref<1x8x32xf32, #tpu.memory_space<vmem>>, vector<1x8x8xf32>,
    %62 = vector.extract_strided_slice %8 {offsets = [0, 0, 8], sizes = [1, 8, 8], strides = [1, 1, 1]} : vector<1x8x32xf32> to vector<1x8x8xf32>
    %63 = vector.extract_strided_slice %9 {offsets = [0, 0, 8], sizes = [1, 8, 8], strides = [1, 1, 1]} : vector<1x8x32xf32> to vector<1x8x8xf32>
    %64 = vector.extract_strided_slice %10 {offsets = [0, 0, 8], sizes = [1, 8, 8], strides = [1, 1, 1]} : vector<1x8x32xf32> to vector<1x8x8xf32>
    "tpu.trace_start"() <{level = 10 : i32, message = "bqd,bkd->bqk"}> : () -> ()
    %cst_32 = arith.constant dense<0.000000e+00> : vector<1x8x8xf32>
    %65 = tpu.matmul %64, %63, %cst_32 {dimension_numbers = #tpu.dot_dimension_numbers<[2], [2], [1], [1], [0, 0, 0, 1, 1, 1], [0], [0]>} : vector<1x8x8xf32>, vector<1x8x8xf32>, vector<1x8x8xf32> -> vector<1x8x8xf32>
    "tpu.trace_stop"() : () -> ()
    %66 = vector.shape_cast %11 : vector<8x8xf32> to vector<1x8x8xf32>
    %67 = arith.addf %65, %66 : vector<1x8x8xf32>
    %cst_33 = arith.constant dense<0xFF800000> : vector<1x8xf32>
    %68 = vector.multi_reduction <maximumf>, %67, %cst_33 [2] : vector<1x8x8xf32> to vector<1x8xf32>
    %69 = vector.shape_cast %68 : vector<1x8xf32> to vector<1x8x1xf32>
    %70 = vector.broadcast %69 : vector<1x8x1xf32> to vector<1x8x8xf32>
    %71 = arith.subf %67, %70 : vector<1x8x8xf32>
    %72 = math.exp %71 : vector<1x8x8xf32>
    %cst_34 = arith.constant dense<0.000000e+00> : vector<1x8xf32>
    %73 = vector.multi_reduction <add>, %72, %cst_34 [2] : vector<1x8x8xf32> to vector<1x8xf32>
    %74 = vector.shape_cast %73 : vector<1x8xf32> to vector<1x8x1xf32>
    "tpu.trace_start"() <{level = 10 : i32, message = "bqk,bkd->bqd"}> : () -> ()
    %cst_35 = arith.constant dense<0.000000e+00> : vector<1x8x8xf32>
    %75 = tpu.matmul %72, %62, %cst_35 {dimension_numbers = #tpu.dot_dimension_numbers<[2], [1], [1], [2], [0, 0, 0, 1, 1, 2], [0], [0]>} : vector<1x8x8xf32>, vector<1x8x8xf32>, vector<1x8x8xf32> -> vector<1x8x8xf32>
    "tpu.trace_stop"() : () -> ()
    %76 = tpu.reciprocal %74 {approx = true} : vector<1x8x1xf32> -> vector<1x8x1xf32>
    %77 = vector.broadcast %76 : vector<1x8x1xf32> to vector<1x8x8xf32>
    %78 = arith.mulf %75, %77 : vector<1x8x8xf32>
    %79 = vector.shape_cast %12 : vector<8x8xf32> to vector<1x8x8xf32>
    %80 = arith.addf %78, %79 : vector<1x8x8xf32>
    %cst_36 = arith.constant dense<0.000000e+00> : vector<1x8xf32>
    %81 = vector.multi_reduction <add>, %80, %cst_36 [2] : vector<1x8x8xf32> to vector<1x8xf32>
    %82 = vector.shape_cast %81 : vector<1x8xf32> to vector<1x8x1xf32>
    %cst_37 = arith.constant 8.000000e+00 : f32
    %83 = vector.broadcast %cst_37 : f32 to vector<1x8x1xf32>
    %84 = arith.divf %82, %83 : vector<1x8x1xf32>
    %85 = vector.broadcast %84 : vector<1x8x1xf32> to vector<1x8x8xf32>
    %86 = arith.subf %80, %85 : vector<1x8x8xf32>
    %87 = arith.mulf %86, %86 : vector<1x8x8xf32>
    %cst_38 = arith.constant dense<0.000000e+00> : vector<1x8xf32>
    %88 = vector.multi_reduction <add>, %87, %cst_38 [2] : vector<1x8x8xf32> to vector<1x8xf32>
    %89 = vector.shape_cast %88 : vector<1x8xf32> to vector<1x8x1xf32>
    %cst_39 = arith.constant 8.000000e+00 : f32
    %90 = vector.broadcast %cst_39 : f32 to vector<1x8x1xf32>
    %91 = arith.divf %89, %90 : vector<1x8x1xf32>
    %92 = vector.broadcast %84 : vector<1x8x1xf32> to vector<1x8x8xf32>
    %93 = arith.subf %80, %92 : vector<1x8x8xf32>
    %cst_40 = arith.constant 9.99999974E-6 : f32
    %94 = vector.broadcast %cst_40 : f32 to vector<1x8x1xf32>
    %95 = arith.addf %91, %94 : vector<1x8x1xf32>
    %96 = math.rsqrt %95 : vector<1x8x1xf32>
    %97 = vector.broadcast %96 : vector<1x8x1xf32> to vector<1x8x8xf32>
    %98 = arith.mulf %93, %97 : vector<1x8x8xf32>
    %c1 = arith.constant 1 : index
    %c0_41 = arith.constant 0 : index
    %c0_42 = arith.constant 0 : index
    %99 = vector.load %arg5[%c1, %c0_41, %c0_42] : memref<4x1x8xf32, #tpu.memory_space<vmem>>, vector<1x1x8xf32>
    %100 = vector.shape_cast %99 : vector<1x1x8xf32> to vector<1x8xf32>
    %101 = vector.shape_cast %100 : vector<1x8xf32> to vector<1x1x8xf32>
    %102 = vector.broadcast %101 : vector<1x1x8xf32> to vector<1x8x8xf32>
    %103 = arith.mulf %98, %102 : vector<1x8x8xf32>
    %c1_43 = arith.constant 1 : index
    %c0_44 = arith.constant 0 : index
    %c0_45 = arith.constant 0 : index
    %104 = vector.load %arg6[%c1_43, %c0_44, %c0_45] : memref<4x1x8xf32, #tpu.memory_space<vmem>>, vector<1x1x8xf32>
    %105 = vector.shape_cast %104 : vector<1x1x8xf32> to vector<1x8xf32>
    %106 = vector.shape_cast %105 : vector<1x8xf32> to vector<1x1x8xf32>
    %107 = vector.broadcast %106 : vector<1x1x8xf32> to vector<1x8x8xf32>
    %108 = arith.addf %103, %107 : vector<1x8x8xf32>
    %109 = arith.addf %108, %62 : vector<1x8x8xf32>
    %c0_46 = arith.constant 0 : index
    %c0_47 = arith.constant 0 : index
    %c8 = arith.constant 8 : index
    %110 = vector.load %arg9[%c0_46, %c0_47, %c8] : memref<1x8x32xf32, #tpu.memory_space<vmem>>, vector<1x8x8xf32>
    tpu.vector_store %arg9[%c0_46, %c0_47, %c8], %109 {strides = array<i32>} : memref<1x8x32xf32, #tpu.memory_space<vmem>>, vector<1x8x8xf32>,
    %111 = vector.extract_strided_slice %8 {offsets = [0, 0, 16], sizes = [1, 8, 8], strides = [1, 1, 1]} : vector<1x8x32xf32> to vector<1x8x8xf32>
    %112 = vector.extract_strided_slice %9 {offsets = [0, 0, 16], sizes = [1, 8, 8], strides = [1, 1, 1]} : vector<1x8x32xf32> to vector<1x8x8xf32>
    %113 = vector.extract_strided_slice %10 {offsets = [0, 0, 16], sizes = [1, 8, 8], strides = [1, 1, 1]} : vector<1x8x32xf32> to vector<1x8x8xf32>
    "tpu.trace_start"() <{level = 10 : i32, message = "bqd,bkd->bqk"}> : () -> ()
    %cst_48 = arith.constant dense<0.000000e+00> : vector<1x8x8xf32>
    %114 = tpu.matmul %113, %112, %cst_48 {dimension_numbers = #tpu.dot_dimension_numbers<[2], [2], [1], [1], [0, 0, 0, 1, 1, 1], [0], [0]>} : vector<1x8x8xf32>, vector<1x8x8xf32>, vector<1x8x8xf32> -> vector<1x8x8xf32>
    "tpu.trace_stop"() : () -> ()
    %115 = vector.shape_cast %11 : vector<8x8xf32> to vector<1x8x8xf32>
    %116 = arith.addf %114, %115 : vector<1x8x8xf32>
    %cst_49 = arith.constant dense<0xFF800000> : vector<1x8xf32>
    %117 = vector.multi_reduction <maximumf>, %116, %cst_49 [2] : vector<1x8x8xf32> to vector<1x8xf32>
    %118 = vector.shape_cast %117 : vector<1x8xf32> to vector<1x8x1xf32>
    %119 = vector.broadcast %118 : vector<1x8x1xf32> to vector<1x8x8xf32>
    %120 = arith.subf %116, %119 : vector<1x8x8xf32>
    %121 = math.exp %120 : vector<1x8x8xf32>
    %cst_50 = arith.constant dense<0.000000e+00> : vector<1x8xf32>
    %122 = vector.multi_reduction <add>, %121, %cst_50 [2] : vector<1x8x8xf32> to vector<1x8xf32>
    %123 = vector.shape_cast %122 : vector<1x8xf32> to vector<1x8x1xf32>
    "tpu.trace_start"() <{level = 10 : i32, message = "bqk,bkd->bqd"}> : () -> ()
    %cst_51 = arith.constant dense<0.000000e+00> : vector<1x8x8xf32>
    %124 = tpu.matmul %121, %111, %cst_51 {dimension_numbers = #tpu.dot_dimension_numbers<[2], [1], [1], [2], [0, 0, 0, 1, 1, 2], [0], [0]>} : vector<1x8x8xf32>, vector<1x8x8xf32>, vector<1x8x8xf32> -> vector<1x8x8xf32>
    "tpu.trace_stop"() : () -> ()
    %125 = tpu.reciprocal %123 {approx = true} : vector<1x8x1xf32> -> vector<1x8x1xf32>
    %126 = vector.broadcast %125 : vector<1x8x1xf32> to vector<1x8x8xf32>
    %127 = arith.mulf %124, %126 : vector<1x8x8xf32>
    %128 = vector.shape_cast %12 : vector<8x8xf32> to vector<1x8x8xf32>
    %129 = arith.addf %127, %128 : vector<1x8x8xf32>
    %cst_52 = arith.constant dense<0.000000e+00> : vector<1x8xf32>
    %130 = vector.multi_reduction <add>, %129, %cst_52 [2] : vector<1x8x8xf32> to vector<1x8xf32>
    %131 = vector.shape_cast %130 : vector<1x8xf32> to vector<1x8x1xf32>
    %cst_53 = arith.constant 8.000000e+00 : f32
    %132 = vector.broadcast %cst_53 : f32 to vector<1x8x1xf32>
    %133 = arith.divf %131, %132 : vector<1x8x1xf32>
    %134 = vector.broadcast %133 : vector<1x8x1xf32> to vector<1x8x8xf32>
    %135 = arith.subf %129, %134 : vector<1x8x8xf32>
    %136 = arith.mulf %135, %135 : vector<1x8x8xf32>
    %cst_54 = arith.constant dense<0.000000e+00> : vector<1x8xf32>
    %137 = vector.multi_reduction <add>, %136, %cst_54 [2] : vector<1x8x8xf32> to vector<1x8xf32>
    %138 = vector.shape_cast %137 : vector<1x8xf32> to vector<1x8x1xf32>
    %cst_55 = arith.constant 8.000000e+00 : f32
    %139 = vector.broadcast %cst_55 : f32 to vector<1x8x1xf32>
    %140 = arith.divf %138, %139 : vector<1x8x1xf32>
    %141 = vector.broadcast %133 : vector<1x8x1xf32> to vector<1x8x8xf32>
    %142 = arith.subf %129, %141 : vector<1x8x8xf32>
    %cst_56 = arith.constant 9.99999974E-6 : f32
    %143 = vector.broadcast %cst_56 : f32 to vector<1x8x1xf32>
    %144 = arith.addf %140, %143 : vector<1x8x1xf32>
    %145 = math.rsqrt %144 : vector<1x8x1xf32>
    %146 = vector.broadcast %145 : vector<1x8x1xf32> to vector<1x8x8xf32>
    %147 = arith.mulf %142, %146 : vector<1x8x8xf32>
    %c2 = arith.constant 2 : index
    %c0_57 = arith.constant 0 : index
    %c0_58 = arith.constant 0 : index
    %148 = vector.load %arg5[%c2, %c0_57, %c0_58] : memref<4x1x8xf32, #tpu.memory_space<vmem>>, vector<1x1x8xf32>
    %149 = vector.shape_cast %148 : vector<1x1x8xf32> to vector<1x8xf32>
    %150 = vector.shape_cast %149 : vector<1x8xf32> to vector<1x1x8xf32>
    %151 = vector.broadcast %150 : vector<1x1x8xf32> to vector<1x8x8xf32>
    %152 = arith.mulf %147, %151 : vector<1x8x8xf32>
    %c2_59 = arith.constant 2 : index
    %c0_60 = arith.constant 0 : index
    %c0_61 = arith.constant 0 : index
    %153 = vector.load %arg6[%c2_59, %c0_60, %c0_61] : memref<4x1x8xf32, #tpu.memory_space<vmem>>, vector<1x1x8xf32>
    %154 = vector.shape_cast %153 : vector<1x1x8xf32> to vector<1x8xf32>
    %155 = vector.shape_cast %154 : vector<1x8xf32> to vector<1x1x8xf32>
    %156 = vector.broadcast %155 : vector<1x1x8xf32> to vector<1x8x8xf32>
    %157 = arith.addf %152, %156 : vector<1x8x8xf32>
    %158 = arith.addf %157, %111 : vector<1x8x8xf32>
    %c0_62 = arith.constant 0 : index
    %c0_63 = arith.constant 0 : index
    %c16 = arith.constant 16 : index
    %159 = vector.load %arg9[%c0_62, %c0_63, %c16] : memref<1x8x32xf32, #tpu.memory_space<vmem>>, vector<1x8x8xf32>
    tpu.vector_store %arg9[%c0_62, %c0_63, %c16], %158 {strides = array<i32>} : memref<1x8x32xf32, #tpu.memory_space<vmem>>, vector<1x8x8xf32>,
    %160 = vector.extract_strided_slice %8 {offsets = [0, 0, 24], sizes = [1, 8, 8], strides = [1, 1, 1]} : vector<1x8x32xf32> to vector<1x8x8xf32>
    %161 = vector.extract_strided_slice %9 {offsets = [0, 0, 24], sizes = [1, 8, 8], strides = [1, 1, 1]} : vector<1x8x32xf32> to vector<1x8x8xf32>
    %162 = vector.extract_strided_slice %10 {offsets = [0, 0, 24], sizes = [1, 8, 8], strides = [1, 1, 1]} : vector<1x8x32xf32> to vector<1x8x8xf32>
    "tpu.trace_start"() <{level = 10 : i32, message = "bqd,bkd->bqk"}> : () -> ()
    %cst_64 = arith.constant dense<0.000000e+00> : vector<1x8x8xf32>
    %163 = tpu.matmul %162, %161, %cst_64 {dimension_numbers = #tpu.dot_dimension_numbers<[2], [2], [1], [1], [0, 0, 0, 1, 1, 1], [0], [0]>} : vector<1x8x8xf32>, vector<1x8x8xf32>, vector<1x8x8xf32> -> vector<1x8x8xf32>
    "tpu.trace_stop"() : () -> ()
    %164 = vector.shape_cast %11 : vector<8x8xf32> to vector<1x8x8xf32>
    %165 = arith.addf %163, %164 : vector<1x8x8xf32>
    %cst_65 = arith.constant dense<0xFF800000> : vector<1x8xf32>
    %166 = vector.multi_reduction <maximumf>, %165, %cst_65 [2] : vector<1x8x8xf32> to vector<1x8xf32>
    %167 = vector.shape_cast %166 : vector<1x8xf32> to vector<1x8x1xf32>
    %168 = vector.broadcast %167 : vector<1x8x1xf32> to vector<1x8x8xf32>
    %169 = arith.subf %165, %168 : vector<1x8x8xf32>
    %170 = math.exp %169 : vector<1x8x8xf32>
    %cst_66 = arith.constant dense<0.000000e+00> : vector<1x8xf32>
    %171 = vector.multi_reduction <add>, %170, %cst_66 [2] : vector<1x8x8xf32> to vector<1x8xf32>
    %172 = vector.shape_cast %171 : vector<1x8xf32> to vector<1x8x1xf32>
    "tpu.trace_start"() <{level = 10 : i32, message = "bqk,bkd->bqd"}> : () -> ()
    %cst_67 = arith.constant dense<0.000000e+00> : vector<1x8x8xf32>
    %173 = tpu.matmul %170, %160, %cst_67 {dimension_numbers = #tpu.dot_dimension_numbers<[2], [1], [1], [2], [0, 0, 0, 1, 1, 2], [0], [0]>} : vector<1x8x8xf32>, vector<1x8x8xf32>, vector<1x8x8xf32> -> vector<1x8x8xf32>
    "tpu.trace_stop"() : () -> ()
    %174 = tpu.reciprocal %172 {approx = true} : vector<1x8x1xf32> -> vector<1x8x1xf32>
    %175 = vector.broadcast %174 : vector<1x8x1xf32> to vector<1x8x8xf32>
    %176 = arith.mulf %173, %175 : vector<1x8x8xf32>
    %177 = vector.shape_cast %12 : vector<8x8xf32> to vector<1x8x8xf32>
    %178 = arith.addf %176, %177 : vector<1x8x8xf32>
    %cst_68 = arith.constant dense<0.000000e+00> : vector<1x8xf32>
    %179 = vector.multi_reduction <add>, %178, %cst_68 [2] : vector<1x8x8xf32> to vector<1x8xf32>
    %180 = vector.shape_cast %179 : vector<1x8xf32> to vector<1x8x1xf32>
    %cst_69 = arith.constant 8.000000e+00 : f32
    %181 = vector.broadcast %cst_69 : f32 to vector<1x8x1xf32>
    %182 = arith.divf %180, %181 : vector<1x8x1xf32>
    %183 = vector.broadcast %182 : vector<1x8x1xf32> to vector<1x8x8xf32>
    %184 = arith.subf %178, %183 : vector<1x8x8xf32>
    %185 = arith.mulf %184, %184 : vector<1x8x8xf32>
    %cst_70 = arith.constant dense<0.000000e+00> : vector<1x8xf32>
    %186 = vector.multi_reduction <add>, %185, %cst_70 [2] : vector<1x8x8xf32> to vector<1x8xf32>
    %187 = vector.shape_cast %186 : vector<1x8xf32> to vector<1x8x1xf32>
    %cst_71 = arith.constant 8.000000e+00 : f32
    %188 = vector.broadcast %cst_71 : f32 to vector<1x8x1xf32>
    %189 = arith.divf %187, %188 : vector<1x8x1xf32>
    %190 = vector.broadcast %182 : vector<1x8x1xf32> to vector<1x8x8xf32>
    %191 = arith.subf %178, %190 : vector<1x8x8xf32>
    %cst_72 = arith.constant 9.99999974E-6 : f32
    %192 = vector.broadcast %cst_72 : f32 to vector<1x8x1xf32>
    %193 = arith.addf %189, %192 : vector<1x8x1xf32>
    %194 = math.rsqrt %193 : vector<1x8x1xf32>
    %195 = vector.broadcast %194 : vector<1x8x1xf32> to vector<1x8x8xf32>
    %196 = arith.mulf %191, %195 : vector<1x8x8xf32>
    %c3 = arith.constant 3 : index
    %c0_73 = arith.constant 0 : index
    %c0_74 = arith.constant 0 : index
    %197 = vector.load %arg5[%c3, %c0_73, %c0_74] : memref<4x1x8xf32, #tpu.memory_space<vmem>>, vector<1x1x8xf32>
    %198 = vector.shape_cast %197 : vector<1x1x8xf32> to vector<1x8xf32>
    %199 = vector.shape_cast %198 : vector<1x8xf32> to vector<1x1x8xf32>
    %200 = vector.broadcast %199 : vector<1x1x8xf32> to vector<1x8x8xf32>
    %201 = arith.mulf %196, %200 : vector<1x8x8xf32>
    %c3_75 = arith.constant 3 : index
    %c0_76 = arith.constant 0 : index
    %c0_77 = arith.constant 0 : index
    %202 = vector.load %arg6[%c3_75, %c0_76, %c0_77] : memref<4x1x8xf32, #tpu.memory_space<vmem>>, vector<1x1x8xf32>
    %203 = vector.shape_cast %202 : vector<1x1x8xf32> to vector<1x8xf32>
    %204 = vector.shape_cast %203 : vector<1x8xf32> to vector<1x1x8xf32>
    %205 = vector.broadcast %204 : vector<1x1x8xf32> to vector<1x8x8xf32>
    %206 = arith.addf %201, %205 : vector<1x8x8xf32>
    %207 = arith.addf %206, %160 : vector<1x8x8xf32>
    %c0_78 = arith.constant 0 : index
    %c0_79 = arith.constant 0 : index
    %c24 = arith.constant 24 : index
    %208 = vector.load %arg9[%c0_78, %c0_79, %c24] : memref<1x8x32xf32, #tpu.memory_space<vmem>>, vector<1x8x8xf32>
    tpu.vector_store %arg9[%c0_78, %c0_79, %c24], %207 {strides = array<i32>} : memref<1x8x32xf32, #tpu.memory_space<vmem>>, vector<1x8x8xf32>,
    return
  }
  func.func @transform_0(%arg0: i32) -> (i32, i32, i32) {
    %c0_i32 = arith.constant 0 : i32
    %c0_i32_0 = arith.constant 0 : i32
    %c0_i32_1 = arith.constant 0 : i32
    return %arg0, %c0_i32, %c0_i32_0 : i32, i32, i32
  }
  func.func @transform_1(%arg0: i32) -> (i32, i32) {
    %c0_i32 = arith.constant 0 : i32
    %c0_i32_0 = arith.constant 0 : i32
    %c0_i32_1 = arith.constant 0 : i32
    return %c0_i32, %c0_i32_0 : i32, i32
  }
  func.func @transform_2(%arg0: i32) -> (i32, i32) {
    %c0_i32 = arith.constant 0 : i32
    %c0_i32_0 = arith.constant 0 : i32
    %c0_i32_1 = arith.constant 0 : i32
    return %c0_i32, %c0_i32_0 : i32, i32
  }
  func.func @transform_3(%arg0: i32) -> (i32, i32) {
    %c0_i32 = arith.constant 0 : i32
    %c0_i32_0 = arith.constant 0 : i32
    %c0_i32_1 = arith.constant 0 : i32
    return %c0_i32, %c0_i32_0 : i32, i32
  }
  func.func @transform_4(%arg0: i32) -> (i32, i32, i32) {
    %c0_i32 = arith.constant 0 : i32
    %c0_i32_0 = arith.constant 0 : i32
    %c0_i32_1 = arith.constant 0 : i32
    %c0_i32_2 = arith.constant 0 : i32
    return %c0_i32, %c0_i32_0, %c0_i32_1 : i32, i32, i32
  }
  func.func @transform_5(%arg0: i32) -> (i32, i32, i32) {
    %c0_i32 = arith.constant 0 : i32
    %c0_i32_0 = arith.constant 0 : i32
    %c0_i32_1 = arith.constant 0 : i32
    %c0_i32_2 = arith.constant 0 : i32
    return %c0_i32, %c0_i32_0, %c0_i32_1 : i32, i32, i32
  }
  func.func @transform_6(%arg0: i32) -> (i32, i32) {
    %c0_i32 = arith.constant 0 : i32
    %c0_i32_0 = arith.constant 0 : i32
    %c0_i32_1 = arith.constant 0 : i32
    return %c0_i32, %c0_i32_0 : i32, i32
  }
  func.func @transform_7(%arg0: i32) -> (i32, i32) {
    %c0_i32 = arith.constant 0 : i32
    %c0_i32_0 = arith.constant 0 : i32
    %c0_i32_1 = arith.constant 0 : i32
    return %c0_i32, %c0_i32_0 : i32, i32
  }
  func.func @transform_8(%arg0: i32) -> (i32, i32, i32) {
    %c0_i32 = arith.constant 0 : i32
    %c0_i32_0 = arith.constant 0 : i32
    %c0_i32_1 = arith.constant 0 : i32
    return %arg0, %c0_i32, %c0_i32_0 : i32, i32, i32
  }
}

</mosaic_0001>

<llo_original>
// kernel: multihead_attention.1
$region0: #{multihead_attention.1}
  #allocation0 [shape = 'u32[]', space=smem, size = 0x4, offset = 0x4, fixed_abs, tag = 'smem constant byte address 0x4 - core index']
  #allocation1 [shape = 'u32[144,128]{1,0:T(1,128)}', space=vmem, size = 0x12000, scoped, tag = 'internal scratch']
  %s0 = inlined_call_operand.vmem [shape: f32[2,8,32], index: 0, kind: input, shape index: {}]
  %s1 = inlined_call_operand.vmem [shape: f32[32,32], index: 1, kind: input, shape index: {}]
  %s2 = inlined_call_operand.vmem [shape: f32[32,32], index: 2, kind: input, shape index: {}]
  %s3 = inlined_call_operand.vmem [shape: f32[32,32], index: 3, kind: input, shape index: {}]
  %s4 = inlined_call_operand.vmem [shape: f32[4,1,8], index: 4, kind: input, shape index: {}]
  %s5 = inlined_call_operand.vmem [shape: f32[4,1,8], index: 5, kind: input, shape index: {}]
  %s6 = inlined_call_operand.vmem [shape: f32[8,8], index: 6, kind: input, shape index: {}]
  %s7 = inlined_call_operand.vmem [shape: f32[8,8], index: 7, kind: input, shape index: {}]
  %s8 = inlined_call_operand.hbm [shape: f32[2,8,32], index: 8, kind: output, shape index: {}]
  %s9 = sld [smem:[#allocation0]]
  $region65: #{multihead_attention.1} parent=0
    _
  %s11 = ssub.s32 1, %s9
  %s12 = scalar_select 0, %s11, %s9
  $region1: #{multihead_attention.1} parent=0
    #allocation2 [shape = 'u8[8192]{0}', space=vmem, size = 0x2000, scoped, tag = 'output window, operand 0']
    #allocation3 [shape = 's32[2]{0}', space=sflag, size = 0x8, scoped, tag = 'scoped memory for multihead_attention.1']
    %13 = vsyncpa [#allocation3], 0
    %s14 = scalar_lea.sflag [#allocation3], 1
    %15 = vsyncpa %s14, 0
    loop: start=0, step=1, limit=4
    $region2: #{multihead_attention.1} parent=1 // loop_pre_header
      _
    $region3: #{multihead_attention.1} parent=1 // loop_header
      %s17 = sphi 0, %s21
      %p18 = scmp.ge.s32.totalorder %s17, 4
      %s27 = sphi 0, %s29
      %s30 = sphi 0, %s27
      %s31 = sphi 0, %s30
      %s47 = sphi 0, %s31
      %s51 = sphi 0, %s51
      %s53 = sphi 0, %s51
      %s54 = sphi 0, %s53
      %s68 = sphi 0, %s54
      %s72 = sphi 0, %s72
      %s74 = sphi 0, %s72
      %s75 = sphi 0, %s74
      %s89 = sphi 0, %s75
      %s93 = sphi 0, %s93
      %s95 = sphi 0, %s93
      %s96 = sphi 0, %s95
      %s110 = sphi 0, %s96
      %s114 = sphi 0, %s114
      %s116 = sphi 0, %s114
      %s117 = sphi 0, %s116
      %s131 = sphi 0, %s117
      %s135 = sphi 0, %s135
      %s137 = sphi 0, %s135
      %s138 = sphi 0, %s137
      %s152 = sphi 0, %s138
      %s156 = sphi 0, %s156
      %s158 = sphi 0, %s156
      %s159 = sphi 0, %s158
      %s173 = sphi 0, %s159
      %s177 = sphi 0, %s177
      %s179 = sphi 0, %s177
      %s180 = sphi 0, %s179
      %s194 = sphi 0, %s180
      %s200 = sphi 0, %s202
      %s203 = sphi 0, %s200
      %s204 = sphi 0, %s203
      %s220 = sphi 0, %s204
    $region4: #{multihead_attention.1} parent=1 // loop_header_branch
      %20 = sbr.rel (%p18) target = $region8
    $region5: #{multihead_attention.1} parent=1 // loop_body
      %s22 = ssub.s32 %s17, 1
      %s23 = ssub.s32 %s17, 2
      %s24 = sadd.s32 %s17, 1
      %s25 = ssub.s32 %s17, %s24
      %p26 = scmp.eq.s32.totalorder %s25, 0
      %s28 = sadd.s32 %s27, 1
      %s29 = scalar_select %p26, %s27, %s28
      %p32 = pneg %p26
      %p33 = scmp.eq.s32.totalorder %s17, 1
      %p34 = por %p32, %p33
      %p35 = scmp.ne.s32.totalorder %s27, %s30
      %p36 = scmp.eq.s32.totalorder %s17, 0
      %p37 = por %p35, %p36
      %p38 = scmp.ne.s32.totalorder %s27, %s30
      %p39 = scmp.eq.s32.totalorder %s22, 1
      %p40 = por %p38, %p39
      %p41 = scmp.ne.s32.totalorder %s30, %s31
      %p42 = scmp.eq.s32.totalorder %s22, 0
      %p43 = por %p41, %p42
      %p44 = scmp.ne.s32.totalorder %s30, %s31
      %p45 = scmp.eq.s32.totalorder %s23, 1
      %p46 = por %p44, %p45
      %p48 = scmp.ne.s32.totalorder %s31, %s47
      %p49 = scmp.eq.s32.totalorder %s23, 0
      %p50 = por %p48, %p49
      %s52 = sadd.s32 %s51, 1
      %p55 = scmp.eq.s32.totalorder %s17, 1
      %p56 = scmp.ne.s32.totalorder %s51, %s53
      %p57 = scmp.eq.s32.totalorder %s17, 0
      %p58 = por %p56, %p57
      %p59 = scmp.ne.s32.totalorder %s51, %s53
      %p60 = scmp.eq.s32.totalorder %s22, 1
      %p61 = por %p59, %p60
      %p62 = scmp.ne.s32.totalorder %s53, %s54
      %p63 = scmp.eq.s32.totalorder %s22, 0
      %p64 = por %p62, %p63
      %p65 = scmp.ne.s32.totalorder %s53, %s54
      %p66 = scmp.eq.s32.totalorder %s23, 1
      %p67 = por %p65, %p66
      %p69 = scmp.ne.s32.totalorder %s54, %s68
      %p70 = scmp.eq.s32.totalorder %s23, 0
      %p71 = por %p69, %p70
      %s73 = sadd.s32 %s72, 1
      %p76 = scmp.eq.s32.totalorder %s17, 1
      %p77 = scmp.ne.s32.totalorder %s72, %s74
      %p78 = scmp.eq.s32.totalorder %s17, 0
      %p79 = por %p77, %p78
      %p80 = scmp.ne.s32.totalorder %s72, %s74
      %p81 = scmp.eq.s32.totalorder %s22, 1
      %p82 = por %p80, %p81
      %p83 = scmp.ne.s32.totalorder %s74, %s75
      %p84 = scmp.eq.s32.totalorder %s22, 0
      %p85 = por %p83, %p84
      %p86 = scmp.ne.s32.totalorder %s74, %s75
      %p87 = scmp.eq.s32.totalorder %s23, 1
      %p88 = por %p86, %p87
      %p90 = scmp.ne.s32.totalorder %s75, %s89
      %p91 = scmp.eq.s32.totalorder %s23, 0
      %p92 = por %p90, %p91
      %s94 = sadd.s32 %s93, 1
      %p97 = scmp.eq.s32.totalorder %s17, 1
      %p98 = scmp.ne.s32.totalorder %s93, %s95
      %p99 = scmp.eq.s32.totalorder %s17, 0
      %p100 = por %p98, %p99
      %p101 = scmp.ne.s32.totalorder %s93, %s95
      %p102 = scmp.eq.s32.totalorder %s22, 1
      %p103 = por %p101, %p102
      %p104 = scmp.ne.s32.totalorder %s95, %s96
      %p105 = scmp.eq.s32.totalorder %s22, 0
      %p106 = por %p104, %p105
      %p107 = scmp.ne.s32.totalorder %s95, %s96
      %p108 = scmp.eq.s32.totalorder %s23, 1
      %p109 = por %p107, %p108
      %p111 = scmp.ne.s32.totalorder %s96, %s110
      %p112 = scmp.eq.s32.totalorder %s23, 0
      %p113 = por %p111, %p112
      %s115 = sadd.s32 %s114, 1
      %p118 = scmp.eq.s32.totalorder %s17, 1
      %p119 = scmp.ne.s32.totalorder %s114, %s116
      %p120 = scmp.eq.s32.totalorder %s17, 0
      %p121 = por %p119, %p120
      %p122 = scmp.ne.s32.totalorder %s114, %s116
      %p123 = scmp.eq.s32.totalorder %s22, 1
      %p124 = por %p122, %p123
      %p125 = scmp.ne.s32.totalorder %s116, %s117
      %p126 = scmp.eq.s32.totalorder %s22, 0
      %p127 = por %p125, %p126
      %p128 = scmp.ne.s32.totalorder %s116, %s117
      %p129 = scmp.eq.s32.totalorder %s23, 1
      %p130 = por %p128, %p129
      %p132 = scmp.ne.s32.totalorder %s117, %s131
      %p133 = scmp.eq.s32.totalorder %s23, 0
      %p134 = por %p132, %p133
      %s136 = sadd.s32 %s135, 1
      %p139 = scmp.eq.s32.totalorder %s17, 1
      %p140 = scmp.ne.s32.totalorder %s135, %s137
      %p141 = scmp.eq.s32.totalorder %s17, 0
      %p142 = por %p140, %p141
      %p143 = scmp.ne.s32.totalorder %s135, %s137
      %p144 = scmp.eq.s32.totalorder %s22, 1
      %p145 = por %p143, %p144
      %p146 = scmp.ne.s32.totalorder %s137, %s138
      %p147 = scmp.eq.s32.totalorder %s22, 0
      %p148 = por %p146, %p147
      %p149 = scmp.ne.s32.totalorder %s137, %s138
      %p150 = scmp.eq.s32.totalorder %s23, 1
      %p151 = por %p149, %p150
      %p153 = scmp.ne.s32.totalorder %s138, %s152
      %p154 = scmp.eq.s32.totalorder %s23, 0
      %p155 = por %p153, %p154
      %s157 = sadd.s32 %s156, 1
      %p160 = scmp.eq.s32.totalorder %s17, 1
      %p161 = scmp.ne.s32.totalorder %s156, %s158
      %p162 = scmp.eq.s32.totalorder %s17, 0
      %p163 = por %p161, %p162
      %p164 = scmp.ne.s32.totalorder %s156, %s158
      %p165 = scmp.eq.s32.totalorder %s22, 1
      %p166 = por %p164, %p165
      %p167 = scmp.ne.s32.totalorder %s158, %s159
      %p168 = scmp.eq.s32.totalorder %s22, 0
      %p169 = por %p167, %p168
      %p170 = scmp.ne.s32.totalorder %s158, %s159
      %p171 = scmp.eq.s32.totalorder %s23, 1
      %p172 = por %p170, %p171
      %p174 = scmp.ne.s32.totalorder %s159, %s173
      %p175 = scmp.eq.s32.totalorder %s23, 0
      %p176 = por %p174, %p175
      %s178 = sadd.s32 %s177, 1
      %p181 = scmp.eq.s32.totalorder %s17, 1
      %p182 = scmp.ne.s32.totalorder %s177, %s179
      %p183 = scmp.eq.s32.totalorder %s17, 0
      %p184 = por %p182, %p183
      %p185 = scmp.ne.s32.totalorder %s177, %s179
      %p186 = scmp.eq.s32.totalorder %s22, 1
      %p187 = por %p185, %p186
      %p188 = scmp.ne.s32.totalorder %s179, %s180
      %p189 = scmp.eq.s32.totalorder %s22, 0
      %p190 = por %p188, %p189
      %p191 = scmp.ne.s32.totalorder %s179, %s180
      %p192 = scmp.eq.s32.totalorder %s23, 1
      %p193 = por %p191, %p192
      %p195 = scmp.ne.s32.totalorder %s180, %s194
      %p196 = scmp.eq.s32.totalorder %s23, 0
      %p197 = por %p195, %p196
      %s198 = ssub.s32 %s17, %s24
      %p199 = scmp.eq.s32.totalorder %s198, 0
      %s201 = sadd.s32 %s200, 1
      %s202 = scalar_select %p199, %s200, %s201
      %p205 = pneg %p199
      %p206 = scmp.eq.s32.totalorder %s17, 1
      %p207 = por %p205, %p206
      %p208 = scmp.ne.s32.totalorder %s200, %s203
      %p209 = scmp.eq.s32.totalorder %s17, 0
      %p210 = por %p208, %p209
      %p211 = scmp.ne.s32.totalorder %s200, %s203
      %p212 = scmp.eq.s32.totalorder %s22, 1
      %p213 = por %p211, %p212
      %p214 = scmp.ne.s32.totalorder %s203, %s204
      %p215 = scmp.eq.s32.totalorder %s22, 0
      %p216 = por %p214, %p215
      %p217 = scmp.ne.s32.totalorder %s203, %s204
      %p218 = scmp.eq.s32.totalorder %s23, 1
      %p219 = por %p217, %p218
      %p221 = scmp.ne.s32.totalorder %s204, %s220
      %p222 = scmp.eq.s32.totalorder %s23, 0
      %p223 = por %p221, %p222
      %p224 = scmp.le.s32.totalorder 1, %s17
      %p225 = scmp.lt.s32.totalorder %s17, 3
      %p226 = pnand %p224, %p225
      %p227 = pneg %p226
      // Predicated region
      $region9: #{multihead_attention.1} parent=5 // pred_check
        _
      $region10: #{multihead_attention.1} parent=5 // pred_check_branch
        %229 = sbr.rel (%p226) target = $region12
      $region11: #{multihead_attention.1} parent=5 // pred_region
        %s230 = ssub.s32 %s17, 1
        // Predicated region
        $region13: #{multihead_attention.1} parent=11 // pred_check
          %p231 = pneg %p64
        $region14: #{multihead_attention.1} parent=11 // pred_check_branch
          %233 = sbr.rel (%p231) target = $region16
        $region15: #{multihead_attention.1} parent=11 // pred_region
          _
        $region16: #{multihead_attention.1} parent=11 // pred_fallthru
          _
        // Predicated region
        $region17: #{multihead_attention.1} parent=11 // pred_check
          %p234 = pneg %p85
        $region18: #{multihead_attention.1} parent=11 // pred_check_branch
          %236 = sbr.rel (%p234) target = $region20
        $region19: #{multihead_attention.1} parent=11 // pred_region
          _
        $region20: #{multihead_attention.1} parent=11 // pred_fallthru
          _
        // Predicated region
        $region21: #{multihead_attention.1} parent=11 // pred_check
          %p237 = pneg %p106
        $region22: #{multihead_attention.1} parent=11 // pred_check_branch
          %239 = sbr.rel (%p237) target = $region24
        $region23: #{multihead_attention.1} parent=11 // pred_region
          _
        $region24: #{multihead_attention.1} parent=11 // pred_fallthru
          _
        // Predicated region
        $region25: #{multihead_attention.1} parent=11 // pred_check
          %p240 = pneg %p127
        $region26: #{multihead_attention.1} parent=11 // pred_check_branch
          %242 = sbr.rel (%p240) target = $region28
        $region27: #{multihead_attention.1} parent=11 // pred_region
          _
        $region28: #{multihead_attention.1} parent=11 // pred_fallthru
          _
        // Predicated region
        $region29: #{multihead_attention.1} parent=11 // pred_check
          %p243 = pneg %p148
        $region30: #{multihead_attention.1} parent=11 // pred_check_branch
          %245 = sbr.rel (%p243) target = $region32
        $region31: #{multihead_attention.1} parent=11 // pred_region
          _
        $region32: #{multihead_attention.1} parent=11 // pred_fallthru
          _
        // Predicated region
        $region33: #{multihead_attention.1} parent=11 // pred_check
          %p246 = pneg %p169
        $region34: #{multihead_attention.1} parent=11 // pred_check_branch
          %248 = sbr.rel (%p246) target = $region36
        $region35: #{multihead_attention.1} parent=11 // pred_region
          _
        $region36: #{multihead_attention.1} parent=11 // pred_fallthru
          _
        // Predicated region
        $region37: #{multihead_attention.1} parent=11 // pred_check
          %p249 = pneg %p190
        $region38: #{multihead_attention.1} parent=11 // pred_check_branch
          %251 = sbr.rel (%p249) target = $region40
        $region39: #{multihead_attention.1} parent=11 // pred_region
          _
        $region40: #{multihead_attention.1} parent=11 // pred_fallthru
          _
      $region12: #{multihead_attention.1} parent=5 // pred_fallthru
        _
      %p252 = scmp.lt.s32.totalorder %s17, 2
      // Predicated region
      $region41: #{multihead_attention.1} parent=5 // pred_check
        %p253 = pneg %p252
      $region42: #{multihead_attention.1} parent=5 // pred_check_branch
        %255 = sbr.rel (%p253) target = $region44
      $region43: #{multihead_attention.1} parent=5 // pred_region
        // Predicated region
        $region45: #{multihead_attention.1} parent=43 // pred_check
          %p256 = pneg %p37
        $region46: #{multihead_attention.1} parent=43 // pred_check_branch
          %258 = sbr.rel (%p256) target = $region48
        $region47: #{multihead_attention.1} parent=43 // pred_region
          %p259 = scmp.lt.s32.totalorder %s17, 1
          %s260 = scalar_select %p259, %s17, 1
          %s261 = smul.addr %s260, 8
          %s262 = scalar_lea.vmem %s0, %s261
        $region48: #{multihead_attention.1} parent=43 // pred_fallthru
          _
      $region44: #{multihead_attention.1} parent=5 // pred_fallthru
        _
      %p263 = scmp.le.s32.totalorder 1, %s17
      %p264 = scmp.lt.s32.totalorder %s17, 3
      %p265 = pnand %p263, %p264
      %p266 = pneg %p265
      // Predicated region
      $region49: #{multihead_attention.1} parent=5 // pred_check
        _
      $region50: #{multihead_attention.1} parent=5 // pred_check_branch
        %268 = sbr.rel (%p265) target = $region52
      $region51: #{multihead_attention.1} parent=5 // pred_region
        %s269 = ssub.s32 %s17, 1
        %p270 = scmp.lt.s32.totalorder %s22, 1
        %s271 = scalar_select %p270, %s22, 1
        %s272 = smul.addr %s271, 8
        %s273 = scalar_lea.vmem %s0, %s272
        %p274 = pneg %p43
        %p275 = pneg %p40
        %p276 = pneg %p64
        %p277 = pneg %p61
        %p278 = pneg %p85
        %p279 = pneg %p82
        %p280 = pneg %p106
        %p281 = pneg %p103
        %p282 = pneg %p127
        %p283 = pneg %p124
        %p284 = pneg %p148
        %p285 = pneg %p145
        %p286 = pneg %p169
        %p287 = pneg %p166
        %p288 = pneg %p190
        %p289 = pneg %p187
        %p290 = pneg %p216
        %p291 = pneg %p213
        %s292 = sand.u32 %s203, 1
        %s293 = scalar_lea.sflag [#allocation3], %s292
        %s294 = sand.u32 %s203, 1
        %s295 = smul.addr %s294, 8
        %s296 = scalar_lea.vmem [#allocation2], %s295
        %p297 = scmp.lt.s32.totalorder %s22, 1
        %s298 = scalar_select %p297, %s22, 1
        %s299 = smul.addr %s298, 8
        %s300 = scalar_lea.vmem %s0, %s299
        %v301 = vld [vmem:[%s300] sm:$0xff]
        %v302 = vld [vmem:[%s1] sm:$0xff]
        %v303 = vld [vmem:[%s1 + $0x8] sm:$0xff]
        %v304 = vld [vmem:[%s1 + $0x10] sm:$0xff]
        %v305 = vld [vmem:[%s1 + $0x18] sm:$0xff]
        %vm306 = vcmask 261120
        %v308 = vsel %vm306, %v301, 0
        %310 = vmatprep.subr.mxu0 0.0
        %311 = vmatpush1.msra.mxu0 %v302
        %312 = vmatprep.subr.mxu0 0.0
        %313 = vmatpush1.msra.mxu0 %v303
        %314 = vmatprep.subr.mxu0 0.0
        %315 = vmatpush1.msra.mxu0 %v304
        %316 = vmatprep.subr.mxu0 0.0
        %317 = vmatpush1.msra.mxu0 %v305
        %318 = vmatprep.subr.mxu0 0.0
        %319 = vmatpush1.msra.mxu0 0.0
        %320 = vmatprep.subr.mxu0 0.0
        %321 = vmatpush1.msra.mxu0 0.0
        %322 = vmatprep.subr.mxu0 0.0
        %323 = vmatpush1.msra.mxu0 0.0
        %324 = vmatprep.subr.mxu0 0.0
        %325 = vmatpush1.msra.mxu0 0.0
        %326 = vmatprep.subr.mxu0 0.0
        %327 = vmatpush1.msra.mxu0 0.0
        %328 = vmatprep.subr.mxu0 0.0
        %329 = vmatpush1.msra.mxu0 0.0
        %330 = vmatprep.subr.mxu0 0.0
        %331 = vmatpush1.msra.mxu0 0.0
        %332 = vmatprep.subr.mxu0 0.0
        %333 = vmatpush1.msra.mxu0 0.0
        %334 = vmatprep.subr.mxu0 0.0
        %335 = vmatpush1.msra.mxu0 0.0
        %336 = vmatprep.subr.mxu0 0.0
        %337 = vmatpush1.msra.mxu0 0.0
        %338 = vmatprep.subr.mxu0 0.0
        %339 = vmatpush1.msra.mxu0 0.0
        %340 = vmatprep.subr.mxu0 0.0
        %341 = vmatpush1.msra.mxu0 0.0
        %342 = vmatprep.subr.mxu0 0.0
        %343 = vmatpush1.msra.mxu0 0.0
        %344 = vmatprep.subr.mxu0 0.0
        %345 = vmatpush1.msra.mxu0 0.0
        %346 = vmatprep.subr.mxu0 0.0
        %347 = vmatpush1.msra.mxu0 0.0
        %348 = vmatprep.subr.mxu0 0.0
        %349 = vmatpush1.msra.mxu0 0.0
        %350 = vmatprep.subr.mxu0 0.0
        %351 = vmatpush1.msra.mxu0 0.0
        %352 = vmatprep.subr.mxu0 0.0
        %353 = vmatpush1.msra.mxu0 0.0
        %354 = vmatprep.subr.mxu0 0.0
        %355 = vmatpush1.msra.mxu0 0.0
        %356 = vmatprep.subr.mxu0 0.0
        %357 = vmatpush1.msra.mxu0 0.0
        %358 = vmatprep.subr.mxu0 0.0
        %359 = vmatpush1.msra.mxu0 0.0
        %360 = vmatprep.subr.mxu0 0.0
        %361 = vmatpush1.msra.mxu0 0.0
        %362 = vmatprep.subr.mxu0 0.0
        %363 = vmatpush1.msra.mxu0 0.0
        %364 = vmatprep.subr.mxu0 0.0
        %365 = vmatpush1.msra.mxu0 0.0
        %366 = vmatprep.subr.mxu0 0.0
        %367 = vmatpush1.msra.mxu0 0.0
        %368 = vmatprep.subr.mxu0 0.0
        %369 = vmatpush1.msra.mxu0 0.0
        %370 = vmatprep.subr.mxu0 0.0
        %371 = vmatpush1.msra.mxu0 0.0
        %372 = vmatprep.subr.mxu0 0.0
        %373 = vmatpush1.msra.mxu0 0.0
        %374 = vmatprep.mubr.f32.mxu0 0.0
        %375 = vmatmul.mubr.f32.gmra.mrb[0].mxu0 %v308
        %v376 = vpop.f32.mrb[0].mxu0
        %v377 = vadd.f32 0.0, %v376
        %v378 = vpop.f32.mrb[0].mxu0
        %379 = vdwg.mxu0
        %v380 = vld [vmem:[%s2] sm:$0xff]
        %v381 = vld [vmem:[%s2 + $0x8] sm:$0xff]
        %v382 = vld [vmem:[%s2 + $0x10] sm:$0xff]
        %v383 = vld [vmem:[%s2 + $0x18] sm:$0xff]
        %v385 = vsel %vm306, %v377, 0
        %387 = vmatprep.subr.mxu0 0.0
        %388 = vmatpush1.msra.mxu0 %v380
        %389 = vmatprep.subr.mxu0 0.0
        %390 = vmatpush1.msra.mxu0 %v381
        %391 = vmatprep.subr.mxu0 0.0
        %392 = vmatpush1.msra.mxu0 %v382
        %393 = vmatprep.subr.mxu0 0.0
        %394 = vmatpush1.msra.mxu0 %v383
        %395 = vmatprep.subr.mxu0 0.0
        %396 = vmatpush1.msra.mxu0 0.0
        %397 = vmatprep.subr.mxu0 0.0
        %398 = vmatpush1.msra.mxu0 0.0
        %399 = vmatprep.subr.mxu0 0.0
        %400 = vmatpush1.msra.mxu0 0.0
        %401 = vmatprep.subr.mxu0 0.0
        %402 = vmatpush1.msra.mxu0 0.0
        %403 = vmatprep.subr.mxu0 0.0
        %404 = vmatpush1.msra.mxu0 0.0
        %405 = vmatprep.subr.mxu0 0.0
        %406 = vmatpush1.msra.mxu0 0.0
        %407 = vmatprep.subr.mxu0 0.0
        %408 = vmatpush1.msra.mxu0 0.0
        %409 = vmatprep.subr.mxu0 0.0
        %410 = vmatpush1.msra.mxu0 0.0
        %411 = vmatprep.subr.mxu0 0.0
        %412 = vmatpush1.msra.mxu0 0.0
        %413 = vmatprep.subr.mxu0 0.0
        %414 = vmatpush1.msra.mxu0 0.0
        %415 = vmatprep.subr.mxu0 0.0
        %416 = vmatpush1.msra.mxu0 0.0
        %417 = vmatprep.subr.mxu0 0.0
        %418 = vmatpush1.msra.mxu0 0.0
        %419 = vmatprep.subr.mxu0 0.0
        %420 = vmatpush1.msra.mxu0 0.0
        %421 = vmatprep.subr.mxu0 0.0
        %422 = vmatpush1.msra.mxu0 0.0
        %423 = vmatprep.subr.mxu0 0.0
        %424 = vmatpush1.msra.mxu0 0.0
        %425 = vmatprep.subr.mxu0 0.0
        %426 = vmatpush1.msra.mxu0 0.0
        %427 = vmatprep.subr.mxu0 0.0
        %428 = vmatpush1.msra.mxu0 0.0
        %429 = vmatprep.subr.mxu0 0.0
        %430 = vmatpush1.msra.mxu0 0.0
        %431 = vmatprep.subr.mxu0 0.0
        %432 = vmatpush1.msra.mxu0 0.0
        %433 = vmatprep.subr.mxu0 0.0
        %434 = vmatpush1.msra.mxu0 0.0
        %435 = vmatprep.subr.mxu0 0.0
        %436 = vmatpush1.msra.mxu0 0.0
        %437 = vmatprep.subr.mxu0 0.0
        %438 = vmatpush1.msra.mxu0 0.0
        %439 = vmatprep.subr.mxu0 0.0
        %440 = vmatpush1.msra.mxu0 0.0
        %441 = vmatprep.subr.mxu0 0.0
        %442 = vmatpush1.msra.mxu0 0.0
        %443 = vmatprep.subr.mxu0 0.0
        %444 = vmatpush1.msra.mxu0 0.0
        %445 = vmatprep.subr.mxu0 0.0
        %446 = vmatpush1.msra.mxu0 0.0
        %447 = vmatprep.subr.mxu0 0.0
        %448 = vmatpush1.msra.mxu0 0.0
        %449 = vmatprep.subr.mxu0 0.0
        %450 = vmatpush1.msra.mxu0 0.0
        %451 = vmatprep.mubr.f32.mxu0 0.0
        %452 = vmatmul.mubr.f32.gmra.mrb[0].mxu0 %v385
        %v453 = vpop.f32.mrb[0].mxu0
        %v454 = vadd.f32 0.0, %v453
        %v455 = vpop.f32.mrb[0].mxu0
        %456 = vdwg.mxu0
        %v457 = vld [vmem:[%s3] sm:$0xff]
        %v458 = vld [vmem:[%s3 + $0x8] sm:$0xff]
        %v459 = vld [vmem:[%s3 + $0x10] sm:$0xff]
        %v460 = vld [vmem:[%s3 + $0x18] sm:$0xff]
        %461 = vmatprep.subr.mxu0 0.0
        %462 = vmatpush1.msra.mxu0 %v457
        %463 = vmatprep.subr.mxu0 0.0
        %464 = vmatpush1.msra.mxu0 %v458
        %465 = vmatprep.subr.mxu0 0.0
        %466 = vmatpush1.msra.mxu0 %v459
        %467 = vmatprep.subr.mxu0 0.0
        %468 = vmatpush1.msra.mxu0 %v460
        %469 = vmatprep.subr.mxu0 0.0
        %470 = vmatpush1.msra.mxu0 0.0
        %471 = vmatprep.subr.mxu0 0.0
        %472 = vmatpush1.msra.mxu0 0.0
        %473 = vmatprep.subr.mxu0 0.0
        %474 = vmatpush1.msra.mxu0 0.0
        %475 = vmatprep.subr.mxu0 0.0
        %476 = vmatpush1.msra.mxu0 0.0
        %477 = vmatprep.subr.mxu0 0.0
        %478 = vmatpush1.msra.mxu0 0.0
        %479 = vmatprep.subr.mxu0 0.0
        %480 = vmatpush1.msra.mxu0 0.0
        %481 = vmatprep.subr.mxu0 0.0
        %482 = vmatpush1.msra.mxu0 0.0
        %483 = vmatprep.subr.mxu0 0.0
        %484 = vmatpush1.msra.mxu0 0.0
        %485 = vmatprep.subr.mxu0 0.0
        %486 = vmatpush1.msra.mxu0 0.0
        %487 = vmatprep.subr.mxu0 0.0
        %488 = vmatpush1.msra.mxu0 0.0
        %489 = vmatprep.subr.mxu0 0.0
        %490 = vmatpush1.msra.mxu0 0.0
        %491 = vmatprep.subr.mxu0 0.0
        %492 = vmatpush1.msra.mxu0 0.0
        %493 = vmatprep.subr.mxu0 0.0
        %494 = vmatpush1.msra.mxu0 0.0
        %495 = vmatprep.subr.mxu0 0.0
        %496 = vmatpush1.msra.mxu0 0.0
        %497 = vmatprep.subr.mxu0 0.0
        %498 = vmatpush1.msra.mxu0 0.0
        %499 = vmatprep.subr.mxu0 0.0
        %500 = vmatpush1.msra.mxu0 0.0
        %501 = vmatprep.subr.mxu0 0.0
        %502 = vmatpush1.msra.mxu0 0.0
        %503 = vmatprep.subr.mxu0 0.0
        %504 = vmatpush1.msra.mxu0 0.0
        %505 = vmatprep.subr.mxu0 0.0
        %506 = vmatpush1.msra.mxu0 0.0
        %507 = vmatprep.subr.mxu0 0.0
        %508 = vmatpush1.msra.mxu0 0.0
        %509 = vmatprep.subr.mxu0 0.0
        %510 = vmatpush1.msra.mxu0 0.0
        %511 = vmatprep.subr.mxu0 0.0
        %512 = vmatpush1.msra.mxu0 0.0
        %513 = vmatprep.subr.mxu0 0.0
        %514 = vmatpush1.msra.mxu0 0.0
        %515 = vmatprep.subr.mxu0 0.0
        %516 = vmatpush1.msra.mxu0 0.0
        %517 = vmatprep.subr.mxu0 0.0
        %518 = vmatpush1.msra.mxu0 0.0
        %519 = vmatprep.subr.mxu0 0.0
        %520 = vmatpush1.msra.mxu0 0.0
        %521 = vmatprep.subr.mxu0 0.0
        %522 = vmatpush1.msra.mxu0 0.0
        %523 = vmatprep.subr.mxu0 0.0
        %524 = vmatpush1.msra.mxu0 0.0
        %525 = vmatprep.mubr.f32.mxu0 0.0
        %526 = vmatmul.mubr.f32.gmra.mrb[0].mxu0 %v385
        %v527 = vpop.f32.mrb[0].mxu0
        %v528 = vadd.f32 0.0, %v527
        %v529 = vpop.f32.mrb[0].mxu0
        %530 = vdwg.mxu0
        %v531 = vld [vmem:[%s6] sm:$0xff]
        %v532 = vld [vmem:[%s7] sm:$0xff]
        %vm533 = vcmask 64512
        %v535 = vsel %vm533, %v528, 0
        %v538 = vsel %vm533, %v454, 0
        %540 = vmatprep.subr.mxu0 0.0
        %541 = vmatpush1.xpose.msra.mxu0 %v538
        %542 = vmatprep.subr.mxu0 0.0
        %543 = vmatpush1.xpose.msra.mxu0 0.0
        %544 = vmatprep.subr.mxu0 0.0
        %545 = vmatpush1.xpose.msra.mxu0 0.0
        %546 = vmatprep.subr.mxu0 0.0
        %547 = vmatpush1.xpose.msra.mxu0 0.0
        %548 = vmatprep.subr.mxu0 0.0
        %549 = vmatpush1.xpose.msra.mxu0 0.0
        %550 = vmatprep.subr.mxu0 0.0
        %551 = vmatpush1.xpose.msra.mxu0 0.0
        %552 = vmatprep.subr.mxu0 0.0
        %553 = vmatpush1.xpose.msra.mxu0 0.0
        %554 = vmatprep.subr.mxu0 0.0
        %555 = vmatpush1.xpose.msra.mxu0 0.0
        %556 = vmatprep.subr.mxu0 0.0
        %557 = vmatpush1.xpose.msra.mxu0 0.0
        %558 = vmatprep.subr.mxu0 0.0
        %559 = vmatpush1.xpose.msra.mxu0 0.0
        %560 = vmatprep.subr.mxu0 0.0
        %561 = vmatpush1.xpose.msra.mxu0 0.0
        %562 = vmatprep.subr.mxu0 0.0
        %563 = vmatpush1.xpose.msra.mxu0 0.0
        %564 = vmatprep.subr.mxu0 0.0
        %565 = vmatpush1.xpose.msra.mxu0 0.0
        %566 = vmatprep.subr.mxu0 0.0
        %567 = vmatpush1.xpose.msra.mxu0 0.0
        %568 = vmatprep.subr.mxu0 0.0
        %569 = vmatpush1.xpose.msra.mxu0 0.0
        %570 = vmatprep.subr.mxu0 0.0
        %571 = vmatpush1.xpose.msra.mxu0 0.0
        %572 = vmatprep.subr.mxu0 0.0
        %573 = vmatpush1.xpose.msra.mxu0 0.0
        %574 = vmatprep.subr.mxu0 0.0
        %575 = vmatpush1.xpose.msra.mxu0 0.0
        %576 = vmatprep.subr.mxu0 0.0
        %577 = vmatpush1.xpose.msra.mxu0 0.0
        %578 = vmatprep.subr.mxu0 0.0
        %579 = vmatpush1.xpose.msra.mxu0 0.0
        %580 = vmatprep.subr.mxu0 0.0
        %581 = vmatpush1.xpose.msra.mxu0 0.0
        %582 = vmatprep.subr.mxu0 0.0
        %583 = vmatpush1.xpose.msra.mxu0 0.0
        %584 = vmatprep.subr.mxu0 0.0
        %585 = vmatpush1.xpose.msra.mxu0 0.0
        %586 = vmatprep.subr.mxu0 0.0
        %587 = vmatpush1.xpose.msra.mxu0 0.0
        %588 = vmatprep.subr.mxu0 0.0
        %589 = vmatpush1.xpose.msra.mxu0 0.0
        %590 = vmatprep.subr.mxu0 0.0
        %591 = vmatpush1.xpose.msra.mxu0 0.0
        %592 = vmatprep.subr.mxu0 0.0
        %593 = vmatpush1.xpose.msra.mxu0 0.0
        %594 = vmatprep.subr.mxu0 0.0
        %595 = vmatpush1.xpose.msra.mxu0 0.0
        %596 = vmatprep.subr.mxu0 0.0
        %597 = vmatpush1.xpose.msra.mxu0 0.0
        %598 = vmatprep.subr.mxu0 0.0
        %599 = vmatpush1.xpose.msra.mxu0 0.0
        %600 = vmatprep.subr.mxu0 0.0
        %601 = vmatpush1.xpose.msra.mxu0 0.0
        %602 = vmatprep.subr.mxu0 0.0
        %603 = vmatpush1.xpose.msra.mxu0 0.0
        %604 = vmatprep.mubr.f32.mxu0 0.0
        %605 = vmatmul.mubr.f32.gmra.mrb[0].mxu0 %v535
        %v606 = vpop.f32.mrb[0].mxu0
        %v607 = vadd.f32 %v531, %v606
        %v608 = vpop.f32.mrb[0].mxu0
        %609 = vdwg.mxu0
        %v610 = vsel %vm533, %v607, -inf
        %611 = vmax.xlane.f32.xlu0 %v610
        %v612 = vpop.xlane.xlu0 %611
        %v613 = vsub.f32 %v607, %v612
        %v614 = vmul.f32 %v613, 1.442695
        %v615 = vpow.pop %v614
        %v616 = vsel %vm533, %v615, 0.0
        %617 = vadd.xlane.f32.xlu0 %v616
        %v618 = vpop.xlane.xlu0 %617
        %v620 = vsel %vm533, %v615, 0
        %622 = vmatprep.subr.mxu0 0.0
        %623 = vmatpush1.msra.mxu0 %v377
        %624 = vmatprep.subr.mxu0 0.0
        %625 = vmatpush1.msra.mxu0 0.0
        %626 = vmatprep.subr.mxu0 0.0
        %627 = vmatpush1.msra.mxu0 0.0
        %628 = vmatprep.subr.mxu0 0.0
        %629 = vmatpush1.msra.mxu0 0.0
        %630 = vmatprep.subr.mxu0 0.0
        %631 = vmatpush1.msra.mxu0 0.0
        %632 = vmatprep.subr.mxu0 0.0
        %633 = vmatpush1.msra.mxu0 0.0
        %634 = vmatprep.subr.mxu0 0.0
        %635 = vmatpush1.msra.mxu0 0.0
        %636 = vmatprep.subr.mxu0 0.0
        %637 = vmatpush1.msra.mxu0 0.0
        %638 = vmatprep.subr.mxu0 0.0
        %639 = vmatpush1.msra.mxu0 0.0
        %640 = vmatprep.subr.mxu0 0.0
        %641 = vmatpush1.msra.mxu0 0.0
        %642 = vmatprep.subr.mxu0 0.0
        %643 = vmatpush1.msra.mxu0 0.0
        %644 = vmatprep.subr.mxu0 0.0
        %645 = vmatpush1.msra.mxu0 0.0
        %646 = vmatprep.subr.mxu0 0.0
        %647 = vmatpush1.msra.mxu0 0.0
        %648 = vmatprep.subr.mxu0 0.0
        %649 = vmatpush1.msra.mxu0 0.0
        %650 = vmatprep.subr.mxu0 0.0
        %651 = vmatpush1.msra.mxu0 0.0
        %652 = vmatprep.subr.mxu0 0.0
        %653 = vmatpush1.msra.mxu0 0.0
        %654 = vmatprep.subr.mxu0 0.0
        %655 = vmatpush1.msra.mxu0 0.0
        %656 = vmatprep.subr.mxu0 0.0
        %657 = vmatpush1.msra.mxu0 0.0
        %658 = vmatprep.subr.mxu0 0.0
        %659 = vmatpush1.msra.mxu0 0.0
        %660 = vmatprep.subr.mxu0 0.0
        %661 = vmatpush1.msra.mxu0 0.0
        %662 = vmatprep.subr.mxu0 0.0
        %663 = vmatpush1.msra.mxu0 0.0
        %664 = vmatprep.subr.mxu0 0.0
        %665 = vmatpush1.msra.mxu0 0.0
        %666 = vmatprep.subr.mxu0 0.0
        %667 = vmatpush1.msra.mxu0 0.0
        %668 = vmatprep.subr.mxu0 0.0
        %669 = vmatpush1.msra.mxu0 0.0
        %670 = vmatprep.subr.mxu0 0.0
        %671 = vmatpush1.msra.mxu0 0.0
        %672 = vmatprep.subr.mxu0 0.0
        %673 = vmatpush1.msra.mxu0 0.0
        %674 = vmatprep.subr.mxu0 0.0
        %675 = vmatpush1.msra.mxu0 0.0
        %676 = vmatprep.subr.mxu0 0.0
        %677 = vmatpush1.msra.mxu0 0.0
        %678 = vmatprep.subr.mxu0 0.0
        %679 = vmatpush1.msra.mxu0 0.0
        %680 = vmatprep.subr.mxu0 0.0
        %681 = vmatpush1.msra.mxu0 0.0
        %682 = vmatprep.subr.mxu0 0.0
        %683 = vmatpush1.msra.mxu0 0.0
        %684 = vmatprep.subr.mxu0 0.0
        %685 = vmatpush1.msra.mxu0 0.0
        %686 = vmatprep.mubr.f32.mxu0 0.0
        %687 = vmatmul.mubr.f32.gmra.mrb[0].mxu0 %v620
        %v688 = vpop.f32.mrb[0].mxu0
        %v689 = vadd.f32 0.0, %v688
        %v690 = vpop.f32.mrb[0].mxu0
        %691 = vdwg.mxu0
        %v692 = vrcp.pop %v618
        %v693 = vmul.f32 %v689, %v692
        %v694 = vadd.f32 %v693, %v532
        %v695 = vsel %vm533, %v694, 0.0
        %696 = vadd.xlane.f32.xlu0 %v695
        %v697 = vpop.xlane.xlu0 %696
        %v698 = vrcp.pop 8.0
        %v699 = vmul.f32 %v697, %v698
        %v700 = vsub.f32 %v694, %v699
        %v701 = vmul.f32 %v700, %v700
        %v702 = vsel %vm533, %v701, 0.0
        %703 = vadd.xlane.f32.xlu0 %v702
        %v704 = vpop.xlane.xlu0 %703
        %v705 = vmul.f32 %v704, %v698
        %v706 = vadd.f32 %v705, 1e-05
        %v707 = vrsqrt.pop %v706
        %v708 = vmul.f32 %v700, %v707
        %v709 = vld [vmem:[%s4] sm:$0x1]
        %v711 = vlaneseq
        %v712 = vshrl.u32 %v711, 7
        %v713 = vsub.s32 0, %v712
        %v714 = vrot.slane %v709, %v713
        %v716 = vmul.f32 %v708, %v714
        %v717 = vld [vmem:[%s5] sm:$0x1]
        %v719 = vlaneseq
        %v720 = vshrl.u32 %v719, 7
        %v721 = vsub.s32 0, %v720
        %v722 = vrot.slane %v717, %v721
        %v724 = vadd.f32 %v716, %v722
        %v725 = vadd.f32 %v724, %v377
        %726 = vst.msk [vmem:[%s296] sm:$0xff] %vm533, %v725
        %727 = vrot.lane.b32.xlu0 %v528, 120
        %v728 = vpop.permute.xlu0 %727
        %729 = vrot.lane.b32.xlu0 %v454, 120
        %v730 = vpop.permute.xlu0 %729
        %v731 = vsel %vm533, %v728, 0
        %v733 = vsel %vm533, %v730, 0
        %735 = vmatprep.subr.mxu0 0.0
        %736 = vmatpush1.xpose.msra.mxu0 %v733
        %737 = vmatprep.subr.mxu0 0.0
        %738 = vmatpush1.xpose.msra.mxu0 0.0
        %739 = vmatprep.subr.mxu0 0.0
        %740 = vmatpush1.xpose.msra.mxu0 0.0
        %741 = vmatprep.subr.mxu0 0.0
        %742 = vmatpush1.xpose.msra.mxu0 0.0
        %743 = vmatprep.subr.mxu0 0.0
        %744 = vmatpush1.xpose.msra.mxu0 0.0
        %745 = vmatprep.subr.mxu0 0.0
        %746 = vmatpush1.xpose.msra.mxu0 0.0
        %747 = vmatprep.subr.mxu0 0.0
        %748 = vmatpush1.xpose.msra.mxu0 0.0
        %749 = vmatprep.subr.mxu0 0.0
        %750 = vmatpush1.xpose.msra.mxu0 0.0
        %751 = vmatprep.subr.mxu0 0.0
        %752 = vmatpush1.xpose.msra.mxu0 0.0
        %753 = vmatprep.subr.mxu0 0.0
        %754 = vmatpush1.xpose.msra.mxu0 0.0
        %755 = vmatprep.subr.mxu0 0.0
        %756 = vmatpush1.xpose.msra.mxu0 0.0
        %757 = vmatprep.subr.mxu0 0.0
        %758 = vmatpush1.xpose.msra.mxu0 0.0
        %759 = vmatprep.subr.mxu0 0.0
        %760 = vmatpush1.xpose.msra.mxu0 0.0
        %761 = vmatprep.subr.mxu0 0.0
        %762 = vmatpush1.xpose.msra.mxu0 0.0
        %763 = vmatprep.subr.mxu0 0.0
        %764 = vmatpush1.xpose.msra.mxu0 0.0
        %765 = vmatprep.subr.mxu0 0.0
        %766 = vmatpush1.xpose.msra.mxu0 0.0
        %767 = vmatprep.subr.mxu0 0.0
        %768 = vmatpush1.xpose.msra.mxu0 0.0
        %769 = vmatprep.subr.mxu0 0.0
        %770 = vmatpush1.xpose.msra.mxu0 0.0
        %771 = vmatprep.subr.mxu0 0.0
        %772 = vmatpush1.xpose.msra.mxu0 0.0
        %773 = vmatprep.subr.mxu0 0.0
        %774 = vmatpush1.xpose.msra.mxu0 0.0
        %775 = vmatprep.subr.mxu0 0.0
        %776 = vmatpush1.xpose.msra.mxu0 0.0
        %777 = vmatprep.subr.mxu0 0.0
        %778 = vmatpush1.xpose.msra.mxu0 0.0
        %779 = vmatprep.subr.mxu0 0.0
        %780 = vmatpush1.xpose.msra.mxu0 0.0
        %781 = vmatprep.subr.mxu0 0.0
        %782 = vmatpush1.xpose.msra.mxu0 0.0
        %783 = vmatprep.subr.mxu0 0.0
        %784 = vmatpush1.xpose.msra.mxu0 0.0
        %785 = vmatprep.subr.mxu0 0.0
        %786 = vmatpush1.xpose.msra.mxu0 0.0
        %787 = vmatprep.subr.mxu0 0.0
        %788 = vmatpush1.xpose.msra.mxu0 0.0
        %789 = vmatprep.subr.mxu0 0.0
        %790 = vmatpush1.xpose.msra.mxu0 0.0
        %791 = vmatprep.subr.mxu0 0.0
        %792 = vmatpush1.xpose.msra.mxu0 0.0
        %793 = vmatprep.subr.mxu0 0.0
        %794 = vmatpush1.xpose.msra.mxu0 0.0
        %795 = vmatprep.subr.mxu0 0.0
        %796 = vmatpush1.xpose.msra.mxu0 0.0
        %797 = vmatprep.subr.mxu0 0.0
        %798 = vmatpush1.xpose.msra.mxu0 0.0
        %799 = vmatprep.mubr.f32.mxu0 0.0
        %800 = vmatmul.mubr.f32.gmra.mrb[0].mxu0 %v731
        %v801 = vpop.f32.mrb[0].mxu0
        %v802 = vadd.f32 %v531, %v801
        %v803 = vpop.f32.mrb[0].mxu0
        %804 = vdwg.mxu0
        %v805 = vsel %vm533, %v802, -inf
        %806 = vmax.xlane.f32.xlu0 %v805
        %v807 = vpop.xlane.xlu0 %806
        %v808 = vsub.f32 %v802, %v807
        %v809 = vmul.f32 %v808, 1.442695
        %v810 = vpow.pop %v809
        %v811 = vsel %vm533, %v810, 0.0
        %812 = vadd.xlane.f32.xlu0 %v811
        %v813 = vpop.xlane.xlu0 %812
        %814 = vrot.lane.b32.xlu0 %v377, 120
        %v815 = vpop.permute.xlu0 %814
        %v818 = vsel %vm533, %v810, 0
        %820 = vmatprep.subr.mxu0 0.0
        %821 = vmatpush1.msra.mxu0 %v815
        %822 = vmatprep.subr.mxu0 0.0
        %823 = vmatpush1.msra.mxu0 0.0
        %824 = vmatprep.subr.mxu0 0.0
        %825 = vmatpush1.msra.mxu0 0.0
        %826 = vmatprep.subr.mxu0 0.0
        %827 = vmatpush1.msra.mxu0 0.0
        %828 = vmatprep.subr.mxu0 0.0
        %829 = vmatpush1.msra.mxu0 0.0
        %830 = vmatprep.subr.mxu0 0.0
        %831 = vmatpush1.msra.mxu0 0.0
        %832 = vmatprep.subr.mxu0 0.0
        %833 = vmatpush1.msra.mxu0 0.0
        %834 = vmatprep.subr.mxu0 0.0
        %835 = vmatpush1.msra.mxu0 0.0
        %836 = vmatprep.subr.mxu0 0.0
        %837 = vmatpush1.msra.mxu0 0.0
        %838 = vmatprep.subr.mxu0 0.0
        %839 = vmatpush1.msra.mxu0 0.0
        %840 = vmatprep.subr.mxu0 0.0
        %841 = vmatpush1.msra.mxu0 0.0
        %842 = vmatprep.subr.mxu0 0.0
        %843 = vmatpush1.msra.mxu0 0.0
        %844 = vmatprep.subr.mxu0 0.0
        %845 = vmatpush1.msra.mxu0 0.0
        %846 = vmatprep.subr.mxu0 0.0
        %847 = vmatpush1.msra.mxu0 0.0
        %848 = vmatprep.subr.mxu0 0.0
        %849 = vmatpush1.msra.mxu0 0.0
        %850 = vmatprep.subr.mxu0 0.0
        %851 = vmatpush1.msra.mxu0 0.0
        %852 = vmatprep.subr.mxu0 0.0
        %853 = vmatpush1.msra.mxu0 0.0
        %854 = vmatprep.subr.mxu0 0.0
        %855 = vmatpush1.msra.mxu0 0.0
        %856 = vmatprep.subr.mxu0 0.0
        %857 = vmatpush1.msra.mxu0 0.0
        %858 = vmatprep.subr.mxu0 0.0
        %859 = vmatpush1.msra.mxu0 0.0
        %860 = vmatprep.subr.mxu0 0.0
        %861 = vmatpush1.msra.mxu0 0.0
        %862 = vmatprep.subr.mxu0 0.0
        %863 = vmatpush1.msra.mxu0 0.0
        %864 = vmatprep.subr.mxu0 0.0
        %865 = vmatpush1.msra.mxu0 0.0
        %866 = vmatprep.subr.mxu0 0.0
        %867 = vmatpush1.msra.mxu0 0.0
        %868 = vmatprep.subr.mxu0 0.0
        %869 = vmatpush1.msra.mxu0 0.0
        %870 = vmatprep.subr.mxu0 0.0
        %871 = vmatpush1.msra.mxu0 0.0
        %872 = vmatprep.subr.mxu0 0.0
        %873 = vmatpush1.msra.mxu0 0.0
        %874 = vmatprep.subr.mxu0 0.0
        %875 = vmatpush1.msra.mxu0 0.0
        %876 = vmatprep.subr.mxu0 0.0
        %877 = vmatpush1.msra.mxu0 0.0
        %878 = vmatprep.subr.mxu0 0.0
        %879 = vmatpush1.msra.mxu0 0.0
        %880 = vmatprep.subr.mxu0 0.0
        %881 = vmatpush1.msra.mxu0 0.0
        %882 = vmatprep.subr.mxu0 0.0
        %883 = vmatpush1.msra.mxu0 0.0
        %884 = vmatprep.mubr.f32.mxu0 0.0
        %885 = vmatmul.mubr.f32.gmra.mrb[0].mxu0 %v818
        %v886 = vpop.f32.mrb[0].mxu0
        %v887 = vadd.f32 0.0, %v886
        %v888 = vpop.f32.mrb[0].mxu0
        %889 = vdwg.mxu0
        %v890 = vrcp.pop %v813
        %v891 = vmul.f32 %v887, %v890
        %v892 = vadd.f32 %v891, %v532
        %v893 = vsel %vm533, %v892, 0.0
        %894 = vadd.xlane.f32.xlu0 %v893
        %v895 = vpop.xlane.xlu0 %894
        %v896 = vmul.f32 %v895, %v698
        %v897 = vsub.f32 %v892, %v896
        %v898 = vmul.f32 %v897, %v897
        %v899 = vsel %vm533, %v898, 0.0
        %900 = vadd.xlane.f32.xlu0 %v899
        %v901 = vpop.xlane.xlu0 %900
        %v902 = vmul.f32 %v901, %v698
        %v903 = vadd.f32 %v902, 1e-05
        %v904 = vrsqrt.pop %v903
        %v905 = vmul.f32 %v897, %v904
        %s906 = scalar_lea.vmem %s4, 1
        %v907 = vld [vmem:[%s906] sm:$0x1]
        %v909 = vlaneseq
        %v910 = vshrl.u32 %v909, 7
        %v911 = vsub.s32 0, %v910
        %v912 = vrot.slane %v907, %v911
        %v914 = vmul.f32 %v905, %v912
        %s915 = scalar_lea.vmem %s5, 1
        %v916 = vld [vmem:[%s915] sm:$0x1]
        %v918 = vlaneseq
        %v919 = vshrl.u32 %v918, 7
        %v920 = vsub.s32 0, %v919
        %v921 = vrot.slane %v916, %v920
        %v923 = vadd.f32 %v914, %v921
        %v924 = vadd.f32 %v923, %v815
        %926 = vrot.lane.b32.xlu0 %v924, 8
        %v927 = vpop.permute.xlu0 %926
        %vm929 = vcmask 130112
        %930 = vst.msk [vmem:[%s296] sm:$0xff] %vm929, %v927
        %931 = vrot.lane.b32.xlu0 %v528, 112
        %v932 = vpop.permute.xlu0 %931
        %933 = vrot.lane.b32.xlu0 %v454, 112
        %v934 = vpop.permute.xlu0 %933
        %v935 = vsel %vm533, %v932, 0
        %v937 = vsel %vm533, %v934, 0
        %939 = vmatprep.subr.mxu0 0.0
        %940 = vmatpush1.xpose.msra.mxu0 %v937
        %941 = vmatprep.subr.mxu0 0.0
        %942 = vmatpush1.xpose.msra.mxu0 0.0
        %943 = vmatprep.subr.mxu0 0.0
        %944 = vmatpush1.xpose.msra.mxu0 0.0
        %945 = vmatprep.subr.mxu0 0.0
        %946 = vmatpush1.xpose.msra.mxu0 0.0
        %947 = vmatprep.subr.mxu0 0.0
        %948 = vmatpush1.xpose.msra.mxu0 0.0
        %949 = vmatprep.subr.mxu0 0.0
        %950 = vmatpush1.xpose.msra.mxu0 0.0
        %951 = vmatprep.subr.mxu0 0.0
        %952 = vmatpush1.xpose.msra.mxu0 0.0
        %953 = vmatprep.subr.mxu0 0.0
        %954 = vmatpush1.xpose.msra.mxu0 0.0
        %955 = vmatprep.subr.mxu0 0.0
        %956 = vmatpush1.xpose.msra.mxu0 0.0
        %957 = vmatprep.subr.mxu0 0.0
        %958 = vmatpush1.xpose.msra.mxu0 0.0
        %959 = vmatprep.subr.mxu0 0.0
        %960 = vmatpush1.xpose.msra.mxu0 0.0
        %961 = vmatprep.subr.mxu0 0.0
        %962 = vmatpush1.xpose.msra.mxu0 0.0
        %963 = vmatprep.subr.mxu0 0.0
        %964 = vmatpush1.xpose.msra.mxu0 0.0
        %965 = vmatprep.subr.mxu0 0.0
        %966 = vmatpush1.xpose.msra.mxu0 0.0
        %967 = vmatprep.subr.mxu0 0.0
        %968 = vmatpush1.xpose.msra.mxu0 0.0
        %969 = vmatprep.subr.mxu0 0.0
        %970 = vmatpush1.xpose.msra.mxu0 0.0
        %971 = vmatprep.subr.mxu0 0.0
        %972 = vmatpush1.xpose.msra.mxu0 0.0
        %973 = vmatprep.subr.mxu0 0.0
        %974 = vmatpush1.xpose.msra.mxu0 0.0
        %975 = vmatprep.subr.mxu0 0.0
        %976 = vmatpush1.xpose.msra.mxu0 0.0
        %977 = vmatprep.subr.mxu0 0.0
        %978 = vmatpush1.xpose.msra.mxu0 0.0
        %979 = vmatprep.subr.mxu0 0.0
        %980 = vmatpush1.xpose.msra.mxu0 0.0
        %981 = vmatprep.subr.mxu0 0.0
        %982 = vmatpush1.xpose.msra.mxu0 0.0
        %983 = vmatprep.subr.mxu0 0.0
        %984 = vmatpush1.xpose.msra.mxu0 0.0
        %985 = vmatprep.subr.mxu0 0.0
        %986 = vmatpush1.xpose.msra.mxu0 0.0
        %987 = vmatprep.subr.mxu0 0.0
        %988 = vmatpush1.xpose.msra.mxu0 0.0
        %989 = vmatprep.subr.mxu0 0.0
        %990 = vmatpush1.xpose.msra.mxu0 0.0
        %991 = vmatprep.subr.mxu0 0.0
        %992 = vmatpush1.xpose.msra.mxu0 0.0
        %993 = vmatprep.subr.mxu0 0.0
        %994 = vmatpush1.xpose.msra.mxu0 0.0
        %995 = vmatprep.subr.mxu0 0.0
        %996 = vmatpush1.xpose.msra.mxu0 0.0
        %997 = vmatprep.subr.mxu0 0.0
        %998 = vmatpush1.xpose.msra.mxu0 0.0
        %999 = vmatprep.subr.mxu0 0.0
        %1000 = vmatpush1.xpose.msra.mxu0 0.0
        %1001 = vmatprep.subr.mxu0 0.0
        %1002 = vmatpush1.xpose.msra.mxu0 0.0
        %1003 = vmatprep.mubr.f32.mxu0 0.0
        %1004 = vmatmul.mubr.f32.gmra.mrb[0].mxu0 %v935
        %v1005 = vpop.f32.mrb[0].mxu0
        %v1006 = vadd.f32 %v531, %v1005
        %v1007 = vpop.f32.mrb[0].mxu0
        %1008 = vdwg.mxu0
        %v1009 = vsel %vm533, %v1006, -inf
        %1010 = vmax.xlane.f32.xlu0 %v1009
        %v1011 = vpop.xlane.xlu0 %1010
        %v1012 = vsub.f32 %v1006, %v1011
        %v1013 = vmul.f32 %v1012, 1.442695
        %v1014 = vpow.pop %v1013
        %v1015 = vsel %vm533, %v1014, 0.0
        %1016 = vadd.xlane.f32.xlu0 %v1015
        %v1017 = vpop.xlane.xlu0 %1016
        %1018 = vrot.lane.b32.xlu0 %v377, 112
        %v1019 = vpop.permute.xlu0 %1018
        %v1022 = vsel %vm533, %v1014, 0
        %1024 = vmatprep.subr.mxu0 0.0
        %1025 = vmatpush1.msra.mxu0 %v1019
        %1026 = vmatprep.subr.mxu0 0.0
        %1027 = vmatpush1.msra.mxu0 0.0
        %1028 = vmatprep.subr.mxu0 0.0
        %1029 = vmatpush1.msra.mxu0 0.0
        %1030 = vmatprep.subr.mxu0 0.0
        %1031 = vmatpush1.msra.mxu0 0.0
        %1032 = vmatprep.subr.mxu0 0.0
        %1033 = vmatpush1.msra.mxu0 0.0
        %1034 = vmatprep.subr.mxu0 0.0
        %1035 = vmatpush1.msra.mxu0 0.0
        %1036 = vmatprep.subr.mxu0 0.0
        %1037 = vmatpush1.msra.mxu0 0.0
        %1038 = vmatprep.subr.mxu0 0.0
        %1039 = vmatpush1.msra.mxu0 0.0
        %1040 = vmatprep.subr.mxu0 0.0
        %1041 = vmatpush1.msra.mxu0 0.0
        %1042 = vmatprep.subr.mxu0 0.0
        %1043 = vmatpush1.msra.mxu0 0.0
        %1044 = vmatprep.subr.mxu0 0.0
        %1045 = vmatpush1.msra.mxu0 0.0
        %1046 = vmatprep.subr.mxu0 0.0
        %1047 = vmatpush1.msra.mxu0 0.0
        %1048 = vmatprep.subr.mxu0 0.0
        %1049 = vmatpush1.msra.mxu0 0.0
        %1050 = vmatprep.subr.mxu0 0.0
        %1051 = vmatpush1.msra.mxu0 0.0
        %1052 = vmatprep.subr.mxu0 0.0
        %1053 = vmatpush1.msra.mxu0 0.0
        %1054 = vmatprep.subr.mxu0 0.0
        %1055 = vmatpush1.msra.mxu0 0.0
        %1056 = vmatprep.subr.mxu0 0.0
        %1057 = vmatpush1.msra.mxu0 0.0
        %1058 = vmatprep.subr.mxu0 0.0
        %1059 = vmatpush1.msra.mxu0 0.0
        %1060 = vmatprep.subr.mxu0 0.0
        %1061 = vmatpush1.msra.mxu0 0.0
        %1062 = vmatprep.subr.mxu0 0.0
        %1063 = vmatpush1.msra.mxu0 0.0
        %1064 = vmatprep.subr.mxu0 0.0
        %1065 = vmatpush1.msra.mxu0 0.0
        %1066 = vmatprep.subr.mxu0 0.0
        %1067 = vmatpush1.msra.mxu0 0.0
        %1068 = vmatprep.subr.mxu0 0.0
        %1069 = vmatpush1.msra.mxu0 0.0
        %1070 = vmatprep.subr.mxu0 0.0
        %1071 = vmatpush1.msra.mxu0 0.0
        %1072 = vmatprep.subr.mxu0 0.0
        %1073 = vmatpush1.msra.mxu0 0.0
        %1074 = vmatprep.subr.mxu0 0.0
        %1075 = vmatpush1.msra.mxu0 0.0
        %1076 = vmatprep.subr.mxu0 0.0
        %1077 = vmatpush1.msra.mxu0 0.0
        %1078 = vmatprep.subr.mxu0 0.0
        %1079 = vmatpush1.msra.mxu0 0.0
        %1080 = vmatprep.subr.mxu0 0.0
        %1081 = vmatpush1.msra.mxu0 0.0
        %1082 = vmatprep.subr.mxu0 0.0
        %1083 = vmatpush1.msra.mxu0 0.0
        %1084 = vmatprep.subr.mxu0 0.0
        %1085 = vmatpush1.msra.mxu0 0.0
        %1086 = vmatprep.subr.mxu0 0.0
        %1087 = vmatpush1.msra.mxu0 0.0
        %1088 = vmatprep.mubr.f32.mxu0 0.0
        %1089 = vmatmul.mubr.f32.gmra.mrb[0].mxu0 %v1022
        %v1090 = vpop.f32.mrb[0].mxu0
        %v1091 = vadd.f32 0.0, %v1090
        %v1092 = vpop.f32.mrb[0].mxu0
        %1093 = vdwg.mxu0
        %v1094 = vrcp.pop %v1017
        %v1095 = vmul.f32 %v1091, %v1094
        %v1096 = vadd.f32 %v1095, %v532
        %v1097 = vsel %vm533, %v1096, 0.0
        %1098 = vadd.xlane.f32.xlu0 %v1097
        %v1099 = vpop.xlane.xlu0 %1098
        %v1100 = vmul.f32 %v1099, %v698
        %v1101 = vsub.f32 %v1096, %v1100
        %v1102 = vmul.f32 %v1101, %v1101
        %v1103 = vsel %vm533, %v1102, 0.0
        %1104 = vadd.xlane.f32.xlu0 %v1103
        %v1105 = vpop.xlane.xlu0 %1104
        %v1106 = vmul.f32 %v1105, %v698
        %v1107 = vadd.f32 %v1106, 1e-05
        %v1108 = vrsqrt.pop %v1107
        %v1109 = vmul.f32 %v1101, %v1108
        %s1110 = scalar_lea.vmem %s4, 2
        %v1111 = vld [vmem:[%s1110] sm:$0x1]
        %v1113 = vlaneseq
        %v1114 = vshrl.u32 %v1113, 7
        %v1115 = vsub.s32 0, %v1114
        %v1116 = vrot.slane %v1111, %v1115
        %v1118 = vmul.f32 %v1109, %v1116
        %s1119 = scalar_lea.vmem %s5, 2
        %v1120 = vld [vmem:[%s1119] sm:$0x1]
        %v1122 = vlaneseq
        %v1123 = vshrl.u32 %v1122, 7
        %v1124 = vsub.s32 0, %v1123
        %v1125 = vrot.slane %v1120, %v1124
        %v1127 = vadd.f32 %v1118, %v1125
        %v1128 = vadd.f32 %v1127, %v1019
        %1130 = vrot.lane.b32.xlu0 %v1128, 16
        %v1131 = vpop.permute.xlu0 %1130
        %vm1133 = vcmask 195712
        %1134 = vst.msk [vmem:[%s296] sm:$0xff] %vm1133, %v1131
        %1135 = vrot.lane.b32.xlu0 %v528, 104
        %v1136 = vpop.permute.xlu0 %1135
        %1137 = vrot.lane.b32.xlu0 %v454, 104
        %v1138 = vpop.permute.xlu0 %1137
        %v1139 = vsel %vm533, %v1136, 0
        %v1141 = vsel %vm533, %v1138, 0
        %1143 = vmatprep.subr.mxu0 0.0
        %1144 = vmatpush1.xpose.msra.mxu0 %v1141
        %1145 = vmatprep.subr.mxu0 0.0
        %1146 = vmatpush1.xpose.msra.mxu0 0.0
        %1147 = vmatprep.subr.mxu0 0.0
        %1148 = vmatpush1.xpose.msra.mxu0 0.0
        %1149 = vmatprep.subr.mxu0 0.0
        %1150 = vmatpush1.xpose.msra.mxu0 0.0
        %1151 = vmatprep.subr.mxu0 0.0
        %1152 = vmatpush1.xpose.msra.mxu0 0.0
        %1153 = vmatprep.subr.mxu0 0.0
        %1154 = vmatpush1.xpose.msra.mxu0 0.0
        %1155 = vmatprep.subr.mxu0 0.0
        %1156 = vmatpush1.xpose.msra.mxu0 0.0
        %1157 = vmatprep.subr.mxu0 0.0
        %1158 = vmatpush1.xpose.msra.mxu0 0.0
        %1159 = vmatprep.subr.mxu0 0.0
        %1160 = vmatpush1.xpose.msra.mxu0 0.0
        %1161 = vmatprep.subr.mxu0 0.0
        %1162 = vmatpush1.xpose.msra.mxu0 0.0
        %1163 = vmatprep.subr.mxu0 0.0
        %1164 = vmatpush1.xpose.msra.mxu0 0.0
        %1165 = vmatprep.subr.mxu0 0.0
        %1166 = vmatpush1.xpose.msra.mxu0 0.0
        %1167 = vmatprep.subr.mxu0 0.0
        %1168 = vmatpush1.xpose.msra.mxu0 0.0
        %1169 = vmatprep.subr.mxu0 0.0
        %1170 = vmatpush1.xpose.msra.mxu0 0.0
        %1171 = vmatprep.subr.mxu0 0.0
        %1172 = vmatpush1.xpose.msra.mxu0 0.0
        %1173 = vmatprep.subr.mxu0 0.0
        %1174 = vmatpush1.xpose.msra.mxu0 0.0
        %1175 = vmatprep.subr.mxu0 0.0
        %1176 = vmatpush1.xpose.msra.mxu0 0.0
        %1177 = vmatprep.subr.mxu0 0.0
        %1178 = vmatpush1.xpose.msra.mxu0 0.0
        %1179 = vmatprep.subr.mxu0 0.0
        %1180 = vmatpush1.xpose.msra.mxu0 0.0
        %1181 = vmatprep.subr.mxu0 0.0
        %1182 = vmatpush1.xpose.msra.mxu0 0.0
        %1183 = vmatprep.subr.mxu0 0.0
        %1184 = vmatpush1.xpose.msra.mxu0 0.0
        %1185 = vmatprep.subr.mxu0 0.0
        %1186 = vmatpush1.xpose.msra.mxu0 0.0
        %1187 = vmatprep.subr.mxu0 0.0
        %1188 = vmatpush1.xpose.msra.mxu0 0.0
        %1189 = vmatprep.subr.mxu0 0.0
        %1190 = vmatpush1.xpose.msra.mxu0 0.0
        %1191 = vmatprep.subr.mxu0 0.0
        %1192 = vmatpush1.xpose.msra.mxu0 0.0
        %1193 = vmatprep.subr.mxu0 0.0
        %1194 = vmatpush1.xpose.msra.mxu0 0.0
        %1195 = vmatprep.subr.mxu0 0.0
        %1196 = vmatpush1.xpose.msra.mxu0 0.0
        %1197 = vmatprep.subr.mxu0 0.0
        %1198 = vmatpush1.xpose.msra.mxu0 0.0
        %1199 = vmatprep.subr.mxu0 0.0
        %1200 = vmatpush1.xpose.msra.mxu0 0.0
        %1201 = vmatprep.subr.mxu0 0.0
        %1202 = vmatpush1.xpose.msra.mxu0 0.0
        %1203 = vmatprep.subr.mxu0 0.0
        %1204 = vmatpush1.xpose.msra.mxu0 0.0
        %1205 = vmatprep.subr.mxu0 0.0
        %1206 = vmatpush1.xpose.msra.mxu0 0.0
        %1207 = vmatprep.mubr.f32.mxu0 0.0
        %1208 = vmatmul.mubr.f32.gmra.mrb[0].mxu0 %v1139
        %v1209 = vpop.f32.mrb[0].mxu0
        %v1210 = vadd.f32 %v531, %v1209
        %v1211 = vpop.f32.mrb[0].mxu0
        %1212 = vdwg.mxu0
        %v1213 = vsel %vm533, %v1210, -inf
        %1214 = vmax.xlane.f32.xlu0 %v1213
        %v1215 = vpop.xlane.xlu0 %1214
        %v1216 = vsub.f32 %v1210, %v1215
        %v1217 = vmul.f32 %v1216, 1.442695
        %v1218 = vpow.pop %v1217
        %v1219 = vsel %vm533, %v1218, 0.0
        %1220 = vadd.xlane.f32.xlu0 %v1219
        %v1221 = vpop.xlane.xlu0 %1220
        %1222 = vrot.lane.b32.xlu0 %v377, 104
        %v1223 = vpop.permute.xlu0 %1222
        %v1226 = vsel %vm533, %v1218, 0
        %1228 = vmatprep.subr.mxu0 0.0
        %1229 = vmatpush1.msra.mxu0 %v1223
        %1230 = vmatprep.subr.mxu0 0.0
        %1231 = vmatpush1.msra.mxu0 0.0
        %1232 = vmatprep.subr.mxu0 0.0
        %1233 = vmatpush1.msra.mxu0 0.0
        %1234 = vmatprep.subr.mxu0 0.0
        %1235 = vmatpush1.msra.mxu0 0.0
        %1236 = vmatprep.subr.mxu0 0.0
        %1237 = vmatpush1.msra.mxu0 0.0
        %1238 = vmatprep.subr.mxu0 0.0
        %1239 = vmatpush1.msra.mxu0 0.0
        %1240 = vmatprep.subr.mxu0 0.0
        %1241 = vmatpush1.msra.mxu0 0.0
        %1242 = vmatprep.subr.mxu0 0.0
        %1243 = vmatpush1.msra.mxu0 0.0
        %1244 = vmatprep.subr.mxu0 0.0
        %1245 = vmatpush1.msra.mxu0 0.0
        %1246 = vmatprep.subr.mxu0 0.0
        %1247 = vmatpush1.msra.mxu0 0.0
        %1248 = vmatprep.subr.mxu0 0.0
        %1249 = vmatpush1.msra.mxu0 0.0
        %1250 = vmatprep.subr.mxu0 0.0
        %1251 = vmatpush1.msra.mxu0 0.0
        %1252 = vmatprep.subr.mxu0 0.0
        %1253 = vmatpush1.msra.mxu0 0.0
        %1254 = vmatprep.subr.mxu0 0.0
        %1255 = vmatpush1.msra.mxu0 0.0
        %1256 = vmatprep.subr.mxu0 0.0
        %1257 = vmatpush1.msra.mxu0 0.0
        %1258 = vmatprep.subr.mxu0 0.0
        %1259 = vmatpush1.msra.mxu0 0.0
        %1260 = vmatprep.subr.mxu0 0.0
        %1261 = vmatpush1.msra.mxu0 0.0
        %1262 = vmatprep.subr.mxu0 0.0
        %1263 = vmatpush1.msra.mxu0 0.0
        %1264 = vmatprep.subr.mxu0 0.0
        %1265 = vmatpush1.msra.mxu0 0.0
        %1266 = vmatprep.subr.mxu0 0.0
        %1267 = vmatpush1.msra.mxu0 0.0
        %1268 = vmatprep.subr.mxu0 0.0
        %1269 = vmatpush1.msra.mxu0 0.0
        %1270 = vmatprep.subr.mxu0 0.0
        %1271 = vmatpush1.msra.mxu0 0.0
        %1272 = vmatprep.subr.mxu0 0.0
        %1273 = vmatpush1.msra.mxu0 0.0
        %1274 = vmatprep.subr.mxu0 0.0
        %1275 = vmatpush1.msra.mxu0 0.0
        %1276 = vmatprep.subr.mxu0 0.0
        %1277 = vmatpush1.msra.mxu0 0.0
        %1278 = vmatprep.subr.mxu0 0.0
        %1279 = vmatpush1.msra.mxu0 0.0
        %1280 = vmatprep.subr.mxu0 0.0
        %1281 = vmatpush1.msra.mxu0 0.0
        %1282 = vmatprep.subr.mxu0 0.0
        %1283 = vmatpush1.msra.mxu0 0.0
        %1284 = vmatprep.subr.mxu0 0.0
        %1285 = vmatpush1.msra.mxu0 0.0
        %1286 = vmatprep.subr.mxu0 0.0
        %1287 = vmatpush1.msra.mxu0 0.0
        %1288 = vmatprep.subr.mxu0 0.0
        %1289 = vmatpush1.msra.mxu0 0.0
        %1290 = vmatprep.subr.mxu0 0.0
        %1291 = vmatpush1.msra.mxu0 0.0
        %1292 = vmatprep.mubr.f32.mxu0 0.0
        %1293 = vmatmul.mubr.f32.gmra.mrb[0].mxu0 %v1226
        %v1294 = vpop.f32.mrb[0].mxu0
        %v1295 = vadd.f32 0.0, %v1294
        %v1296 = vpop.f32.mrb[0].mxu0
        %1297 = vdwg.mxu0
        %v1298 = vrcp.pop %v1221
        %v1299 = vmul.f32 %v1295, %v1298
        %v1300 = vadd.f32 %v1299, %v532
        %v1301 = vsel %vm533, %v1300, 0.0
        %1302 = vadd.xlane.f32.xlu0 %v1301
        %v1303 = vpop.xlane.xlu0 %1302
        %v1304 = vmul.f32 %v1303, %v698
        %v1305 = vsub.f32 %v1300, %v1304
        %v1306 = vmul.f32 %v1305, %v1305
        %v1307 = vsel %vm533, %v1306, 0.0
        %1308 = vadd.xlane.f32.xlu0 %v1307
        %v1309 = vpop.xlane.xlu0 %1308
        %v1310 = vmul.f32 %v1309, %v698
        %v1311 = vadd.f32 %v1310, 1e-05
        %v1312 = vrsqrt.pop %v1311
        %v1313 = vmul.f32 %v1305, %v1312
        %s1314 = scalar_lea.vmem %s4, 3
        %v1315 = vld [vmem:[%s1314] sm:$0x1]
        %v1317 = vlaneseq
        %v1318 = vshrl.u32 %v1317, 7
        %v1319 = vsub.s32 0, %v1318
        %v1320 = vrot.slane %v1315, %v1319
        %v1322 = vmul.f32 %v1313, %v1320
        %s1323 = scalar_lea.vmem %s5, 3
        %v1324 = vld [vmem:[%s1323] sm:$0x1]
        %v1326 = vlaneseq
        %v1327 = vshrl.u32 %v1326, 7
        %v1328 = vsub.s32 0, %v1327
        %v1329 = vrot.slane %v1324, %v1328
        %v1331 = vadd.f32 %v1322, %v1329
        %v1332 = vadd.f32 %v1331, %v1223
        %1334 = vrot.lane.b32.xlu0 %v1332, 24
        %v1335 = vpop.permute.xlu0 %1334
        %vm1337 = vcmask 261312
        %1338 = vst.msk [vmem:[%s296] sm:$0xff] %vm1337, %v1335
        %s1339 = sand.u32 %s203, 1
        %s1340 = scalar_lea.sflag [#allocation3], %s1339
        %s1341 = sand.u32 %s203, 1
        %s1342 = smul.addr %s1341, 8
        %s1343 = scalar_lea.vmem [#allocation2], %s1342
        // Predicated region
        $region53: #{multihead_attention.1} parent=51 // pred_check
          %p1344 = pneg %p213
        $region54: #{multihead_attention.1} parent=51 // pred_check_branch
          %1346 = sbr.rel (%p1344) target = $region56
        $region55: #{multihead_attention.1} parent=51 // pred_region
          %s1348 = ssub.s32 128, 128
          %1349 = vsyncadd %s1340, %s1348
          %s1350 = smul.addr %s22, 128
          %s1351 = scalar_lea.hbm %s8, %s1350
          %s1353 = sshll.u32 %s1343, 4
          %s1354 = int_to_ptr.vmem [resolvable:$true] %s1353
          %1356 = dma.vmem_to_hbm [thread:$0]  %s1354, 128, %s1351, %s1340
        $region56: #{multihead_attention.1} parent=51 // pred_fallthru
          _
      $region52: #{multihead_attention.1} parent=5 // pred_fallthru
        _
      %p1357 = scmp.le.s32.totalorder 2, %s17
      // Predicated region
      $region57: #{multihead_attention.1} parent=5 // pred_check
        %p1358 = pneg %p1357
      $region58: #{multihead_attention.1} parent=5 // pred_check_branch
        %1360 = sbr.rel (%p1358) target = $region60
      $region59: #{multihead_attention.1} parent=5 // pred_region
        %s1361 = ssub.s32 %s17, 2
        // Predicated region
        $region61: #{multihead_attention.1} parent=59 // pred_check
          %p1362 = pneg %p219
        $region62: #{multihead_attention.1} parent=59 // pred_check_branch
          %1364 = sbr.rel (%p1362) target = $region64
        $region63: #{multihead_attention.1} parent=59 // pred_region
          %s1365 = sand.u32 %s204, 1
          %s1366 = scalar_lea.sflag [#allocation3], %s1365
          %s1367 = sand.u32 %s204, 1
          %s1368 = smul.addr %s1367, 8
          %s1369 = scalar_lea.vmem [#allocation2], %s1368
          %1370 = dma.done %s1366, 128
        $region64: #{multihead_attention.1} parent=59 // pred_fallthru
          _
      $region60: #{multihead_attention.1} parent=5 // pred_fallthru
        _
    $region6: #{multihead_attention.1} parent=1 // loop_footer
      %s21 = sadd.s32 1, %s17
    $region7: #{multihead_attention.1} parent=1 // loop_footer_branch
      %16 = sbr.rel target = $region3
    $region8: #{multihead_attention.1} parent=1 // loop_exit
      _
    %1371 = vsyncpa [#allocation3], 1
    %s1372 = scalar_lea.sflag [#allocation3], 1
    %1373 = vsyncpa %s1372, 1

</llo_original>
